<compile_context>
chip_gen: v6e
topology: v6e:2x2x1
jax: 0.10.0
libtpu: 0.0.40
codegen_flags: <defaults>
</compile_context>

<pallas_src>
import jax
import jax.numpy as jnp
from jax.experimental import pallas as pl
from jax.experimental.pallas import tpu as pltpu


def _vmem_spec():
    # Whole (small) array resident in VMEM, no grid tiling.
    return pl.BlockSpec(memory_space=pltpu.MemorySpace.VMEM)


# --------------------------- fused LSTM + FC kernel ---------------------------
def _make_fused_kernel(L, T, B, H, I, J1, J2, C):
    """Fused LSTM (L layers, unrolled T steps) + fc1/fc2/fc3 + logsigmoid.

    Ref order:
      inputs : x2d (T*B, I),
               packed_l ((in_l+H+1), 4H) for l in 0..L-1   [W_ih^T ; W_hh^T ; b_ih+b_hh],
               h0 (L, B, H), c0 (L, B, H),
               w1s (T, H, B*J1), w2_t (J1, J2), w3_t (J2, C), fcb (1, J1+J2+C)
      outputs: logits (1, C), hT (L, B, H), cT (L, B, H)
      scratch: hbuf (T*B, H)   (only if L > 1)
    """
    n_in = L + 7

    def kernel(*refs):
        x2d_ref = refs[0]
        packed_refs = refs[1:1 + L]
        h0_ref = refs[1 + L]
        c0_ref = refs[2 + L]
        w1s_ref = refs[3 + L]
        w2_ref = refs[4 + L]
        w3_ref = refs[5 + L]
        fcb_ref = refs[6 + L]
        logits_ref, hT_ref, cT_ref = refs[n_in], refs[n_in + 1], refs[n_in + 2]
        hbuf_ref = refs[n_in + 3] if L > 1 else None

        # fc1 accumulator: z[b, b*J1 + j] collects sum_{t,h} h_t[b,h] * w1s[t,h,b*J1+j]
        z = jnp.zeros((B, B * J1), jnp.float32)

        for l in range(L):
            in_l = I if l == 0 else H
            p_ref = packed_refs[l]
            wih_t = p_ref[0:in_l, :]                      # (in_l, 4H)
            whh_t = p_ref[in_l:in_l + H, :]               # (H, 4H)
            bias = p_ref[in_l + H:in_l + H + 1, :]        # (1, 4H) = b_ih + b_hh
            is_last = (l == L - 1)

            # Hoisted input projection + combined bias: one matmul over all T*B rows.
            src = x2d_ref[...] if l == 0 else hbuf_ref[...]
            xg = jnp.dot(src, wih_t,
                         preferred_element_type=jnp.float32) + bias   # (T*B, 4H)

            h = h0_ref[l]                                 # (B, H)
            c = c0_ref[l]                                 # (B, H)

            # TODO(synk): stage whh_t in MXU weight regs (matmul_push_rhs) here.
            for t in range(T):                            # fully unrolled, T static
                gates = xg[t * B:(t + 1) * B, :] + jnp.dot(
                    h, whh_t, preferred_element_type=jnp.float32)     # (B, 4H)
                sig = jax.nn.sigmoid(gates)                           # whole block
                g_g = jnp.tanh(gates[:, 2 * H:3 * H])                 # g-gate only
                i_g = sig[:, 0 * H:1 * H]
                f_g = sig[:, 1 * H:2 * H]
                o_g = sig[:, 3 * H:4 * H]
                c = f_g * c + i_g * g_g
                h = o_g * jnp.tanh(c)

                if is_last:
                    # fc1 folded into the loop: aligned (B,H)@(H,B*J1) matmul,
                    # accumulated in registers -> no flatten / no masked stores.
                    z = z + jnp.dot(h, w1s_ref[t],
                                    preferred_element_type=jnp.float32)
                else:
                    # One aligned (B,H) block store per step for next layer input.
                    hbuf_ref[t * B:(t + 1) * B, :] = h

            hT_ref[l] = h
            cT_ref[l] = c

        # FC head: tanh(fc1) -> tanh(fc2) -> tanh(fc3) -> logsigmoid (dropout p=0).
        b1 = fcb_ref[:, 0:J1]
        b2 = fcb_ref[:, J1:J1 + J2]
        b3 = fcb_ref[:, J1 + J2:J1 + J2 + C]
        h1 = b1
        for bb in range(B):                               # diagonal b-blocks of z
            h1 = h1 + z[bb:bb + 1, bb * J1:(bb + 1) * J1]
        h1 = jnp.tanh(h1)
        h2 = jnp.tanh(jnp.dot(h1, w2_ref[...],
                              preferred_element_type=jnp.float32) + b2)
        h3 = jnp.tanh(jnp.dot(h2, w3_ref[...],
                              preferred_element_type=jnp.float32) + b3)
        # numerically stable log(sigmoid(x)) = min(x, 0) - log1p(exp(-|x|))
        logits_ref[...] = jnp.minimum(h3, 0.0) - jnp.log1p(jnp.exp(-jnp.abs(h3)))

    return kernel


def _build_forward_fn(num_layers, seq_len, num_features, hidden_size,
                      input_size, hidden1, hidden2, num_classes):
    L, T, B, H, I = num_layers, seq_len, num_features, hidden_size, input_size
    J1, J2, C = hidden1, hidden2, num_classes
    n_in = L + 7
    scratch = (pltpu.VMEM((T * B, H), jnp.float32),) if L > 1 else ()

    pallas_fn = pl.pallas_call(
        _make_fused_kernel(L, T, B, H, I, J1, J2, C),
        out_shape=(jax.ShapeDtypeStruct((1, C), jnp.float32),
                   jax.ShapeDtypeStruct((L, B, H), jnp.float32),
                   jax.ShapeDtypeStruct((L, B, H), jnp.float32)),
        in_specs=[_vmem_spec()] * n_in,
        out_specs=(_vmem_spec(), _vmem_spec(), _vmem_spec()),
        scratch_shapes=scratch,
    )

    def forward(x, h0, c0, packed_lstm, w1s, w2_t, w3_t, fcb):
        x2d = x.reshape(T * B, I)        # contiguous row-major reshape (free under jit)
        logits, hT, cT = pallas_fn(x2d, *packed_lstm, h0, c0, w1s, w2_t, w3_t, fcb)
        return logits, (hT, cT)

    return jax.jit(forward)


# ------------------------------ pure-JAX reference ----------------------------
def _reference_forward(x, h0, c0, lstm_params, fc_params, H):
    """Matches the PyTorch Model.forward semantics (dropout p=0)."""
    w1, b1, w2, b2, w3, b3 = fc_params
    T = x.shape[0]
    L = h0.shape[0]
    seq = x
    hs, cs = [], []
    for l in range(L):
        w_ih, w_hh, b_ih, b_hh = lstm_params[l]
        h, c = h0[l], c0[l]
        outs = []
        for t in range(T):
            g = seq[t] @ w_ih.T + b_ih + h @ w_hh.T + b_hh
            i_g = jax.nn.sigmoid(g[:, 0 * H:1 * H])
            f_g = jax.nn.sigmoid(g[:, 1 * H:2 * H])
            g_g = jnp.tanh(g[:, 2 * H:3 * H])
            o_g = jax.nn.sigmoid(g[:, 3 * H:4 * H])
            c = f_g * c + i_g * g_g
            h = o_g * jnp.tanh(c)
            outs.append(h)
        seq = jnp.stack(outs, axis=0)
        hs.append(h)
        cs.append(c)
    flat = seq.reshape(1, -1)
    h1 = jnp.tanh(flat @ w1.T + b1)
    h2 = jnp.tanh(h1 @ w2.T + b2)
    h3 = jnp.tanh(h2 @ w3.T + b3)
    return jax.nn.log_sigmoid(h3), (jnp.stack(hs), jnp.stack(cs))


# --------------------------------- Model glue ---------------------------------
class ModelPallas:
    def __init__(self, input_size, num_layers, hidden_size, seq_len,
                 num_features, dropout, hidden1, hidden2, num_classes, key):
        self.input_size = input_size
        self.num_layers = num_layers
        self.hidden_size = hidden_size
        self.seq_len = seq_len
        self.num_features = num_features
        self.hidden1 = hidden1
        self.hidden2 = hidden2
        self.num_classes = num_classes
        self.dropout = dropout  # p=0 -> identity in forward

        def uni(k, shape, scale):
            return jax.random.uniform(k, shape, jnp.float32, -scale, scale)

        keys = iter(jax.random.split(key, 4 * num_layers + 6))
        s_lstm = 1.0 / float(hidden_size) ** 0.5
        self.lstm_params = []
        for layer in range(num_layers):
            in_dim = input_size if layer == 0 else hidden_size
            w_ih = uni(next(keys), (4 * hidden_size, in_dim), s_lstm)
            w_hh = uni(next(keys), (4 * hidden_size, hidden_size), s_lstm)
            b_ih = uni(next(keys), (4 * hidden_size,), s_lstm)
            b_hh = uni(next(keys), (4 * hidden_size,), s_lstm)
            self.lstm_params.append((w_ih, w_hh, b_ih, b_hh))

        fc1_in = seq_len * num_features * hidden_size
        self.w1 = uni(next(keys), (hidden1, fc1_in), 1.0 / fc1_in ** 0.5)
        self.b1 = uni(next(keys), (hidden1,), 1.0 / fc1_in ** 0.5)
        self.w2 = uni(next(keys), (hidden2, hidden1), 1.0 / hidden1 ** 0.5)
        self.b2 = uni(next(keys), (hidden2,), 1.0 / hidden1 ** 0.5)
        self.w3 = uni(next(keys), (num_classes, hidden2), 1.0 / hidden2 ** 0.5)
        self.b3 = uni(next(keys), (num_classes,), 1.0 / hidden2 ** 0.5)

        # ---- kernel-side parameter packing, computed ONCE ----
        T, B, H = seq_len, num_features, hidden_size
        # One packed tensor per LSTM layer: [W_ih^T ; W_hh^T ; (b_ih + b_hh)]
        self._packed_lstm = tuple(
            jnp.concatenate([w_ih.T, w_hh.T, (b_ih + b_hh)[None, :]], axis=0)
            for (w_ih, w_hh, b_ih, b_hh) in self.lstm_params)
        # fc1 weight permuted so the (t,b,h) flatten never materializes in-kernel:
        #   w1s[t, h, b*hidden1 + j] = w1[j, (t*B + b)*H + h]
        self._w1s = (self.w1.reshape(hidden1, T, B, H)
                     .transpose(1, 3, 2, 0)
                     .reshape(T, H, B * hidden1))
        self._w2_t = self.w2.T
        self._w3_t = self.w3.T
        self._fcb = jnp.concatenate([self.b1, self.b2, self.b3])[None, :]

        self._forward = _build_forward_fn(num_layers, seq_len, num_features,
                                          hidden_size, input_size,
                                          hidden1, hidden2, num_classes)

    def init_states(self):
        z = jnp.zeros((self.num_layers, self.num_features, self.hidden_size),
                      jnp.float32)
        return (z, z)

    def forward(self, x, states):
        h0, c0 = states
        return self._forward(x, h0, c0, self._packed_lstm, self._w1s,
                             self._w2_t, self._w3_t, self._fcb)


if __name__ == "__main__":
    # Small deterministic config.
    input_size = 8
    num_layers = 1
    hidden_size = 32
    seq_len = 8
    num_features = 4       # plays the role of the batch dim in this model
    hidden1, hidden2, num_classes = 64, 32, 8
    dropout = 0.0

    key = jax.random.PRNGKey(0)
    k_param, k_x = jax.random.split(key)

    model = ModelPallas(input_size, num_layers, hidden_size, seq_len,
                        num_features, dropout, hidden1, hidden2, num_classes,
                        k_param)

    x = jax.random.normal(k_x, (seq_len, num_features, input_size), jnp.float32)
    states = model.init_states()

    out, (hT, cT) = model.forward(x, states)
    jax.block_until_ready(out)
    jax.block_until_ready(hT)
    jax.block_until_ready(cT)

    assert out.shape == (1, num_classes)
    assert hT.shape == (num_layers, num_features, hidden_size)
    assert cT.shape == (num_layers, num_features, hidden_size)
    assert bool(jnp.all(out <= 0.0))          # log-sigmoid outputs are non-positive
    assert bool(jnp.all(jnp.isfinite(out)))

    # Correctness check against a pure-JAX reference of the PyTorch module.
    ref_out, (ref_hT, ref_cT) = _reference_forward(
        x, states[0], states[1], model.lstm_params,
        (model.w1, model.b1, model.w2, model.b2, model.w3, model.b3),
        hidden_size)
    assert bool(jnp.allclose(out, ref_out, atol=2e-3, rtol=2e-3))
    assert bool(jnp.allclose(hT, ref_hT, atol=2e-3, rtol=2e-3))
    assert bool(jnp.allclose(cT, ref_cT, atol=2e-3, rtol=2e-3))

    print("KERNEL_OK")
</pallas_src>

<mosaic_0001>
module attributes {stable_mosaic.version = 11 : i64} {
  func.func @kernel(%arg0: memref<32x8xf32, #tpu.memory_space<vmem>>, %arg1: memref<41x128xf32, #tpu.memory_space<vmem>>, %arg2: memref<1x4x32xf32, #tpu.memory_space<vmem>>, %arg3: memref<1x4x32xf32, #tpu.memory_space<vmem>>, %arg4: memref<8x32x256xf32, #tpu.memory_space<vmem>>, %arg5: memref<64x32xf32, #tpu.memory_space<vmem>>, %arg6: memref<32x8xf32, #tpu.memory_space<vmem>>, %arg7: memref<1x104xf32, #tpu.memory_space<vmem>>, %arg8: memref<1x8xf32, #tpu.memory_space<vmem>>, %arg9: memref<1x4x32xf32, #tpu.memory_space<vmem>>, %arg10: memref<1x4x32xf32, #tpu.memory_space<vmem>>) attributes {dimension_semantics = [], scalar_prefetch = 0 : i64, scratch_operands = 0 : i64, tpu.core_type = #tpu.core_type<tc>} {
    %cst = arith.constant 0.000000e+00 : f32
    %0 = vector.broadcast %cst : f32 to vector<4x256xf32>
    %c0 = arith.constant 0 : index
    %c0_0 = arith.constant 0 : index
    %1 = vector.load %arg1[%c0, %c0_0] : memref<41x128xf32, #tpu.memory_space<vmem>>, vector<8x128xf32>
    %c8 = arith.constant 8 : index
    %c0_1 = arith.constant 0 : index
    %2 = vector.load %arg1[%c8, %c0_1] : memref<41x128xf32, #tpu.memory_space<vmem>>, vector<32x128xf32>
    %c40 = arith.constant 40 : index
    %c0_2 = arith.constant 0 : index
    %3 = vector.load %arg1[%c40, %c0_2] : memref<41x128xf32, #tpu.memory_space<vmem>>, vector<1x128xf32>
    %c0_3 = arith.constant 0 : index
    %c0_4 = arith.constant 0 : index
    %4 = vector.load %arg0[%c0_3, %c0_4] : memref<32x8xf32, #tpu.memory_space<vmem>>, vector<32x8xf32>
    %cst_5 = arith.constant dense<0.000000e+00> : vector<32x128xf32>
    %5 = tpu.matmul %4, %1, %cst_5 {dimension_numbers = #tpu.dot_dimension_numbers<[1], [0], [0], [1], [0, 0, 1, 1], [], []>} : vector<32x8xf32>, vector<8x128xf32>, vector<32x128xf32> -> vector<32x128xf32>
    %6 = vector.broadcast %3 : vector<1x128xf32> to vector<32x128xf32>
    %7 = arith.addf %5, %6 : vector<32x128xf32>
    %c0_6 = arith.constant 0 : index
    %c0_7 = arith.constant 0 : index
    %c0_8 = arith.constant 0 : index
    %8 = vector.load %arg2[%c0_6, %c0_7, %c0_8] : memref<1x4x32xf32, #tpu.memory_space<vmem>>, vector<1x4x32xf32>
    %9 = vector.shape_cast %8 : vector<1x4x32xf32> to vector<4x32xf32>
    %c0_9 = arith.constant 0 : index
    %c0_10 = arith.constant 0 : index
    %c0_11 = arith.constant 0 : index
    %10 = vector.load %arg3[%c0_9, %c0_10, %c0_11] : memref<1x4x32xf32, #tpu.memory_space<vmem>>, vector<1x4x32xf32>
    %11 = vector.shape_cast %10 : vector<1x4x32xf32> to vector<4x32xf32>
    %12 = vector.extract_strided_slice %7 {offsets = [0, 0], sizes = [4, 128], strides = [1, 1]} : vector<32x128xf32> to vector<4x128xf32>
    %cst_12 = arith.constant dense<0.000000e+00> : vector<4x128xf32>
    %13 = tpu.matmul %9, %2, %cst_12 {dimension_numbers = #tpu.dot_dimension_numbers<[1], [0], [0], [1], [0, 0, 1, 1], [], []>} : vector<4x32xf32>, vector<32x128xf32>, vector<4x128xf32> -> vector<4x128xf32>
    %14 = arith.addf %12, %13 : vector<4x128xf32>
    %15 = arith.negf %14 : vector<4x128xf32>
    %16 = math.exp %15 : vector<4x128xf32>
    %cst_13 = arith.constant 1.000000e+00 : f32
    %17 = vector.broadcast %cst_13 : f32 to vector<4x128xf32>
    %18 = arith.addf %17, %16 : vector<4x128xf32>
    %19 = arith.divf %17, %18 : vector<4x128xf32>
    %20 = vector.extract_strided_slice %14 {offsets = [0, 64], sizes = [4, 32], strides = [1, 1]} : vector<4x128xf32> to vector<4x32xf32>
    %21 = math.tanh %20 : vector<4x32xf32>
    %22 = vector.extract_strided_slice %19 {offsets = [0, 0], sizes = [4, 32], strides = [1, 1]} : vector<4x128xf32> to vector<4x32xf32>
    %23 = vector.extract_strided_slice %19 {offsets = [0, 32], sizes = [4, 32], strides = [1, 1]} : vector<4x128xf32> to vector<4x32xf32>
    %24 = vector.extract_strided_slice %19 {offsets = [0, 96], sizes = [4, 32], strides = [1, 1]} : vector<4x128xf32> to vector<4x32xf32>
    %25 = arith.mulf %23, %11 : vector<4x32xf32>
    %26 = arith.mulf %22, %21 : vector<4x32xf32>
    %27 = arith.addf %25, %26 : vector<4x32xf32>
    %28 = math.tanh %27 : vector<4x32xf32>
    %29 = arith.mulf %24, %28 : vector<4x32xf32>
    %c0_14 = arith.constant 0 : index
    %c0_15 = arith.constant 0 : index
    %c0_16 = arith.constant 0 : index
    %30 = vector.load %arg4[%c0_14, %c0_15, %c0_16] : memref<8x32x256xf32, #tpu.memory_space<vmem>>, vector<1x32x256xf32>
    %31 = vector.shape_cast %30 : vector<1x32x256xf32> to vector<32x256xf32>
    %cst_17 = arith.constant dense<0.000000e+00> : vector<4x256xf32>
    %32 = tpu.matmul %29, %31, %cst_17 {dimension_numbers = #tpu.dot_dimension_numbers<[1], [0], [0], [1], [0, 0, 1, 1], [], []>} : vector<4x32xf32>, vector<32x256xf32>, vector<4x256xf32> -> vector<4x256xf32>
    %33 = arith.addf %0, %32 : vector<4x256xf32>
    %34 = vector.extract_strided_slice %7 {offsets = [4, 0], sizes = [4, 128], strides = [1, 1]} : vector<32x128xf32> to vector<4x128xf32>
    %cst_18 = arith.constant dense<0.000000e+00> : vector<4x128xf32>
    %35 = tpu.matmul %29, %2, %cst_18 {dimension_numbers = #tpu.dot_dimension_numbers<[1], [0], [0], [1], [0, 0, 1, 1], [], []>} : vector<4x32xf32>, vector<32x128xf32>, vector<4x128xf32> -> vector<4x128xf32>
    %36 = arith.addf %34, %35 : vector<4x128xf32>
    %37 = arith.negf %36 : vector<4x128xf32>
    %38 = math.exp %37 : vector<4x128xf32>
    %cst_19 = arith.constant 1.000000e+00 : f32
    %39 = vector.broadcast %cst_19 : f32 to vector<4x128xf32>
    %40 = arith.addf %39, %38 : vector<4x128xf32>
    %41 = arith.divf %39, %40 : vector<4x128xf32>
    %42 = vector.extract_strided_slice %36 {offsets = [0, 64], sizes = [4, 32], strides = [1, 1]} : vector<4x128xf32> to vector<4x32xf32>
    %43 = math.tanh %42 : vector<4x32xf32>
    %44 = vector.extract_strided_slice %41 {offsets = [0, 0], sizes = [4, 32], strides = [1, 1]} : vector<4x128xf32> to vector<4x32xf32>
    %45 = vector.extract_strided_slice %41 {offsets = [0, 32], sizes = [4, 32], strides = [1, 1]} : vector<4x128xf32> to vector<4x32xf32>
    %46 = vector.extract_strided_slice %41 {offsets = [0, 96], sizes = [4, 32], strides = [1, 1]} : vector<4x128xf32> to vector<4x32xf32>
    %47 = arith.mulf %45, %27 : vector<4x32xf32>
    %48 = arith.mulf %44, %43 : vector<4x32xf32>
    %49 = arith.addf %47, %48 : vector<4x32xf32>
    %50 = math.tanh %49 : vector<4x32xf32>
    %51 = arith.mulf %46, %50 : vector<4x32xf32>
    %c1 = arith.constant 1 : index
    %c0_20 = arith.constant 0 : index
    %c0_21 = arith.constant 0 : index
    %52 = vector.load %arg4[%c1, %c0_20, %c0_21] : memref<8x32x256xf32, #tpu.memory_space<vmem>>, vector<1x32x256xf32>
    %53 = vector.shape_cast %52 : vector<1x32x256xf32> to vector<32x256xf32>
    %cst_22 = arith.constant dense<0.000000e+00> : vector<4x256xf32>
    %54 = tpu.matmul %51, %53, %cst_22 {dimension_numbers = #tpu.dot_dimension_numbers<[1], [0], [0], [1], [0, 0, 1, 1], [], []>} : vector<4x32xf32>, vector<32x256xf32>, vector<4x256xf32> -> vector<4x256xf32>
    %55 = arith.addf %33, %54 : vector<4x256xf32>
    %56 = vector.extract_strided_slice %7 {offsets = [8, 0], sizes = [4, 128], strides = [1, 1]} : vector<32x128xf32> to vector<4x128xf32>
    %cst_23 = arith.constant dense<0.000000e+00> : vector<4x128xf32>
    %57 = tpu.matmul %51, %2, %cst_23 {dimension_numbers = #tpu.dot_dimension_numbers<[1], [0], [0], [1], [0, 0, 1, 1], [], []>} : vector<4x32xf32>, vector<32x128xf32>, vector<4x128xf32> -> vector<4x128xf32>
    %58 = arith.addf %56, %57 : vector<4x128xf32>
    %59 = arith.negf %58 : vector<4x128xf32>
    %60 = math.exp %59 : vector<4x128xf32>
    %cst_24 = arith.constant 1.000000e+00 : f32
    %61 = vector.broadcast %cst_24 : f32 to vector<4x128xf32>
    %62 = arith.addf %61, %60 : vector<4x128xf32>
    %63 = arith.divf %61, %62 : vector<4x128xf32>
    %64 = vector.extract_strided_slice %58 {offsets = [0, 64], sizes = [4, 32], strides = [1, 1]} : vector<4x128xf32> to vector<4x32xf32>
    %65 = math.tanh %64 : vector<4x32xf32>
    %66 = vector.extract_strided_slice %63 {offsets = [0, 0], sizes = [4, 32], strides = [1, 1]} : vector<4x128xf32> to vector<4x32xf32>
    %67 = vector.extract_strided_slice %63 {offsets = [0, 32], sizes = [4, 32], strides = [1, 1]} : vector<4x128xf32> to vector<4x32xf32>
    %68 = vector.extract_strided_slice %63 {offsets = [0, 96], sizes = [4, 32], strides = [1, 1]} : vector<4x128xf32> to vector<4x32xf32>
    %69 = arith.mulf %67, %49 : vector<4x32xf32>
    %70 = arith.mulf %66, %65 : vector<4x32xf32>
    %71 = arith.addf %69, %70 : vector<4x32xf32>
    %72 = math.tanh %71 : vector<4x32xf32>
    %73 = arith.mulf %68, %72 : vector<4x32xf32>
    %c2 = arith.constant 2 : index
    %c0_25 = arith.constant 0 : index
    %c0_26 = arith.constant 0 : index
    %74 = vector.load %arg4[%c2, %c0_25, %c0_26] : memref<8x32x256xf32, #tpu.memory_space<vmem>>, vector<1x32x256xf32>
    %75 = vector.shape_cast %74 : vector<1x32x256xf32> to vector<32x256xf32>
    %cst_27 = arith.constant dense<0.000000e+00> : vector<4x256xf32>
    %76 = tpu.matmul %73, %75, %cst_27 {dimension_numbers = #tpu.dot_dimension_numbers<[1], [0], [0], [1], [0, 0, 1, 1], [], []>} : vector<4x32xf32>, vector<32x256xf32>, vector<4x256xf32> -> vector<4x256xf32>
    %77 = arith.addf %55, %76 : vector<4x256xf32>
    %78 = vector.extract_strided_slice %7 {offsets = [12, 0], sizes = [4, 128], strides = [1, 1]} : vector<32x128xf32> to vector<4x128xf32>
    %cst_28 = arith.constant dense<0.000000e+00> : vector<4x128xf32>
    %79 = tpu.matmul %73, %2, %cst_28 {dimension_numbers = #tpu.dot_dimension_numbers<[1], [0], [0], [1], [0, 0, 1, 1], [], []>} : vector<4x32xf32>, vector<32x128xf32>, vector<4x128xf32> -> vector<4x128xf32>
    %80 = arith.addf %78, %79 : vector<4x128xf32>
    %81 = arith.negf %80 : vector<4x128xf32>
    %82 = math.exp %81 : vector<4x128xf32>
    %cst_29 = arith.constant 1.000000e+00 : f32
    %83 = vector.broadcast %cst_29 : f32 to vector<4x128xf32>
    %84 = arith.addf %83, %82 : vector<4x128xf32>
    %85 = arith.divf %83, %84 : vector<4x128xf32>
    %86 = vector.extract_strided_slice %80 {offsets = [0, 64], sizes = [4, 32], strides = [1, 1]} : vector<4x128xf32> to vector<4x32xf32>
    %87 = math.tanh %86 : vector<4x32xf32>
    %88 = vector.extract_strided_slice %85 {offsets = [0, 0], sizes = [4, 32], strides = [1, 1]} : vector<4x128xf32> to vector<4x32xf32>
    %89 = vector.extract_strided_slice %85 {offsets = [0, 32], sizes = [4, 32], strides = [1, 1]} : vector<4x128xf32> to vector<4x32xf32>
    %90 = vector.extract_strided_slice %85 {offsets = [0, 96], sizes = [4, 32], strides = [1, 1]} : vector<4x128xf32> to vector<4x32xf32>
    %91 = arith.mulf %89, %71 : vector<4x32xf32>
    %92 = arith.mulf %88, %87 : vector<4x32xf32>
    %93 = arith.addf %91, %92 : vector<4x32xf32>
    %94 = math.tanh %93 : vector<4x32xf32>
    %95 = arith.mulf %90, %94 : vector<4x32xf32>
    %c3 = arith.constant 3 : index
    %c0_30 = arith.constant 0 : index
    %c0_31 = arith.constant 0 : index
    %96 = vector.load %arg4[%c3, %c0_30, %c0_31] : memref<8x32x256xf32, #tpu.memory_space<vmem>>, vector<1x32x256xf32>
    %97 = vector.shape_cast %96 : vector<1x32x256xf32> to vector<32x256xf32>
    %cst_32 = arith.constant dense<0.000000e+00> : vector<4x256xf32>
    %98 = tpu.matmul %95, %97, %cst_32 {dimension_numbers = #tpu.dot_dimension_numbers<[1], [0], [0], [1], [0, 0, 1, 1], [], []>} : vector<4x32xf32>, vector<32x256xf32>, vector<4x256xf32> -> vector<4x256xf32>
    %99 = arith.addf %77, %98 : vector<4x256xf32>
    %100 = vector.extract_strided_slice %7 {offsets = [16, 0], sizes = [4, 128], strides = [1, 1]} : vector<32x128xf32> to vector<4x128xf32>
    %cst_33 = arith.constant dense<0.000000e+00> : vector<4x128xf32>
    %101 = tpu.matmul %95, %2, %cst_33 {dimension_numbers = #tpu.dot_dimension_numbers<[1], [0], [0], [1], [0, 0, 1, 1], [], []>} : vector<4x32xf32>, vector<32x128xf32>, vector<4x128xf32> -> vector<4x128xf32>
    %102 = arith.addf %100, %101 : vector<4x128xf32>
    %103 = arith.negf %102 : vector<4x128xf32>
    %104 = math.exp %103 : vector<4x128xf32>
    %cst_34 = arith.constant 1.000000e+00 : f32
    %105 = vector.broadcast %cst_34 : f32 to vector<4x128xf32>
    %106 = arith.addf %105, %104 : vector<4x128xf32>
    %107 = arith.divf %105, %106 : vector<4x128xf32>
    %108 = vector.extract_strided_slice %102 {offsets = [0, 64], sizes = [4, 32], strides = [1, 1]} : vector<4x128xf32> to vector<4x32xf32>
    %109 = math.tanh %108 : vector<4x32xf32>
    %110 = vector.extract_strided_slice %107 {offsets = [0, 0], sizes = [4, 32], strides = [1, 1]} : vector<4x128xf32> to vector<4x32xf32>
    %111 = vector.extract_strided_slice %107 {offsets = [0, 32], sizes = [4, 32], strides = [1, 1]} : vector<4x128xf32> to vector<4x32xf32>
    %112 = vector.extract_strided_slice %107 {offsets = [0, 96], sizes = [4, 32], strides = [1, 1]} : vector<4x128xf32> to vector<4x32xf32>
    %113 = arith.mulf %111, %93 : vector<4x32xf32>
    %114 = arith.mulf %110, %109 : vector<4x32xf32>
    %115 = arith.addf %113, %114 : vector<4x32xf32>
    %116 = math.tanh %115 : vector<4x32xf32>
    %117 = arith.mulf %112, %116 : vector<4x32xf32>
    %c4 = arith.constant 4 : index
    %c0_35 = arith.constant 0 : index
    %c0_36 = arith.constant 0 : index
    %118 = vector.load %arg4[%c4, %c0_35, %c0_36] : memref<8x32x256xf32, #tpu.memory_space<vmem>>, vector<1x32x256xf32>
    %119 = vector.shape_cast %118 : vector<1x32x256xf32> to vector<32x256xf32>
    %cst_37 = arith.constant dense<0.000000e+00> : vector<4x256xf32>
    %120 = tpu.matmul %117, %119, %cst_37 {dimension_numbers = #tpu.dot_dimension_numbers<[1], [0], [0], [1], [0, 0, 1, 1], [], []>} : vector<4x32xf32>, vector<32x256xf32>, vector<4x256xf32> -> vector<4x256xf32>
    %121 = arith.addf %99, %120 : vector<4x256xf32>
    %122 = vector.extract_strided_slice %7 {offsets = [20, 0], sizes = [4, 128], strides = [1, 1]} : vector<32x128xf32> to vector<4x128xf32>
    %cst_38 = arith.constant dense<0.000000e+00> : vector<4x128xf32>
    %123 = tpu.matmul %117, %2, %cst_38 {dimension_numbers = #tpu.dot_dimension_numbers<[1], [0], [0], [1], [0, 0, 1, 1], [], []>} : vector<4x32xf32>, vector<32x128xf32>, vector<4x128xf32> -> vector<4x128xf32>
    %124 = arith.addf %122, %123 : vector<4x128xf32>
    %125 = arith.negf %124 : vector<4x128xf32>
    %126 = math.exp %125 : vector<4x128xf32>
    %cst_39 = arith.constant 1.000000e+00 : f32
    %127 = vector.broadcast %cst_39 : f32 to vector<4x128xf32>
    %128 = arith.addf %127, %126 : vector<4x128xf32>
    %129 = arith.divf %127, %128 : vector<4x128xf32>
    %130 = vector.extract_strided_slice %124 {offsets = [0, 64], sizes = [4, 32], strides = [1, 1]} : vector<4x128xf32> to vector<4x32xf32>
    %131 = math.tanh %130 : vector<4x32xf32>
    %132 = vector.extract_strided_slice %129 {offsets = [0, 0], sizes = [4, 32], strides = [1, 1]} : vector<4x128xf32> to vector<4x32xf32>
    %133 = vector.extract_strided_slice %129 {offsets = [0, 32], sizes = [4, 32], strides = [1, 1]} : vector<4x128xf32> to vector<4x32xf32>
    %134 = vector.extract_strided_slice %129 {offsets = [0, 96], sizes = [4, 32], strides = [1, 1]} : vector<4x128xf32> to vector<4x32xf32>
    %135 = arith.mulf %133, %115 : vector<4x32xf32>
    %136 = arith.mulf %132, %131 : vector<4x32xf32>
    %137 = arith.addf %135, %136 : vector<4x32xf32>
    %138 = math.tanh %137 : vector<4x32xf32>
    %139 = arith.mulf %134, %138 : vector<4x32xf32>
    %c5 = arith.constant 5 : index
    %c0_40 = arith.constant 0 : index
    %c0_41 = arith.constant 0 : index
    %140 = vector.load %arg4[%c5, %c0_40, %c0_41] : memref<8x32x256xf32, #tpu.memory_space<vmem>>, vector<1x32x256xf32>
    %141 = vector.shape_cast %140 : vector<1x32x256xf32> to vector<32x256xf32>
    %cst_42 = arith.constant dense<0.000000e+00> : vector<4x256xf32>
    %142 = tpu.matmul %139, %141, %cst_42 {dimension_numbers = #tpu.dot_dimension_numbers<[1], [0], [0], [1], [0, 0, 1, 1], [], []>} : vector<4x32xf32>, vector<32x256xf32>, vector<4x256xf32> -> vector<4x256xf32>
    %143 = arith.addf %121, %142 : vector<4x256xf32>
    %144 = vector.extract_strided_slice %7 {offsets = [24, 0], sizes = [4, 128], strides = [1, 1]} : vector<32x128xf32> to vector<4x128xf32>
    %cst_43 = arith.constant dense<0.000000e+00> : vector<4x128xf32>
    %145 = tpu.matmul %139, %2, %cst_43 {dimension_numbers = #tpu.dot_dimension_numbers<[1], [0], [0], [1], [0, 0, 1, 1], [], []>} : vector<4x32xf32>, vector<32x128xf32>, vector<4x128xf32> -> vector<4x128xf32>
    %146 = arith.addf %144, %145 : vector<4x128xf32>
    %147 = arith.negf %146 : vector<4x128xf32>
    %148 = math.exp %147 : vector<4x128xf32>
    %cst_44 = arith.constant 1.000000e+00 : f32
    %149 = vector.broadcast %cst_44 : f32 to vector<4x128xf32>
    %150 = arith.addf %149, %148 : vector<4x128xf32>
    %151 = arith.divf %149, %150 : vector<4x128xf32>
    %152 = vector.extract_strided_slice %146 {offsets = [0, 64], sizes = [4, 32], strides = [1, 1]} : vector<4x128xf32> to vector<4x32xf32>
    %153 = math.tanh %152 : vector<4x32xf32>
    %154 = vector.extract_strided_slice %151 {offsets = [0, 0], sizes = [4, 32], strides = [1, 1]} : vector<4x128xf32> to vector<4x32xf32>
    %155 = vector.extract_strided_slice %151 {offsets = [0, 32], sizes = [4, 32], strides = [1, 1]} : vector<4x128xf32> to vector<4x32xf32>
    %156 = vector.extract_strided_slice %151 {offsets = [0, 96], sizes = [4, 32], strides = [1, 1]} : vector<4x128xf32> to vector<4x32xf32>
    %157 = arith.mulf %155, %137 : vector<4x32xf32>
    %158 = arith.mulf %154, %153 : vector<4x32xf32>
    %159 = arith.addf %157, %158 : vector<4x32xf32>
    %160 = math.tanh %159 : vector<4x32xf32>
    %161 = arith.mulf %156, %160 : vector<4x32xf32>
    %c6 = arith.constant 6 : index
    %c0_45 = arith.constant 0 : index
    %c0_46 = arith.constant 0 : index
    %162 = vector.load %arg4[%c6, %c0_45, %c0_46] : memref<8x32x256xf32, #tpu.memory_space<vmem>>, vector<1x32x256xf32>
    %163 = vector.shape_cast %162 : vector<1x32x256xf32> to vector<32x256xf32>
    %cst_47 = arith.constant dense<0.000000e+00> : vector<4x256xf32>
    %164 = tpu.matmul %161, %163, %cst_47 {dimension_numbers = #tpu.dot_dimension_numbers<[1], [0], [0], [1], [0, 0, 1, 1], [], []>} : vector<4x32xf32>, vector<32x256xf32>, vector<4x256xf32> -> vector<4x256xf32>
    %165 = arith.addf %143, %164 : vector<4x256xf32>
    %166 = vector.extract_strided_slice %7 {offsets = [28, 0], sizes = [4, 128], strides = [1, 1]} : vector<32x128xf32> to vector<4x128xf32>
    %cst_48 = arith.constant dense<0.000000e+00> : vector<4x128xf32>
    %167 = tpu.matmul %161, %2, %cst_48 {dimension_numbers = #tpu.dot_dimension_numbers<[1], [0], [0], [1], [0, 0, 1, 1], [], []>} : vector<4x32xf32>, vector<32x128xf32>, vector<4x128xf32> -> vector<4x128xf32>
    %168 = arith.addf %166, %167 : vector<4x128xf32>
    %169 = arith.negf %168 : vector<4x128xf32>
    %170 = math.exp %169 : vector<4x128xf32>
    %cst_49 = arith.constant 1.000000e+00 : f32
    %171 = vector.broadcast %cst_49 : f32 to vector<4x128xf32>
    %172 = arith.addf %171, %170 : vector<4x128xf32>
    %173 = arith.divf %171, %172 : vector<4x128xf32>
    %174 = vector.extract_strided_slice %168 {offsets = [0, 64], sizes = [4, 32], strides = [1, 1]} : vector<4x128xf32> to vector<4x32xf32>
    %175 = math.tanh %174 : vector<4x32xf32>
    %176 = vector.extract_strided_slice %173 {offsets = [0, 0], sizes = [4, 32], strides = [1, 1]} : vector<4x128xf32> to vector<4x32xf32>
    %177 = vector.extract_strided_slice %173 {offsets = [0, 32], sizes = [4, 32], strides = [1, 1]} : vector<4x128xf32> to vector<4x32xf32>
    %178 = vector.extract_strided_slice %173 {offsets = [0, 96], sizes = [4, 32], strides = [1, 1]} : vector<4x128xf32> to vector<4x32xf32>
    %179 = arith.mulf %177, %159 : vector<4x32xf32>
    %180 = arith.mulf %176, %175 : vector<4x32xf32>
    %181 = arith.addf %179, %180 : vector<4x32xf32>
    %182 = math.tanh %181 : vector<4x32xf32>
    %183 = arith.mulf %178, %182 : vector<4x32xf32>
    %c7 = arith.constant 7 : index
    %c0_50 = arith.constant 0 : index
    %c0_51 = arith.constant 0 : index
    %184 = vector.load %arg4[%c7, %c0_50, %c0_51] : memref<8x32x256xf32, #tpu.memory_space<vmem>>, vector<1x32x256xf32>
    %185 = vector.shape_cast %184 : vector<1x32x256xf32> to vector<32x256xf32>
    %cst_52 = arith.constant dense<0.000000e+00> : vector<4x256xf32>
    %186 = tpu.matmul %183, %185, %cst_52 {dimension_numbers = #tpu.dot_dimension_numbers<[1], [0], [0], [1], [0, 0, 1, 1], [], []>} : vector<4x32xf32>, vector<32x256xf32>, vector<4x256xf32> -> vector<4x256xf32>
    %187 = arith.addf %165, %186 : vector<4x256xf32>
    %c0_53 = arith.constant 0 : index
    %c0_54 = arith.constant 0 : index
    %c0_55 = arith.constant 0 : index
    %188 = vector.load %arg9[%c0_53, %c0_54, %c0_55] : memref<1x4x32xf32, #tpu.memory_space<vmem>>, vector<1x4x32xf32>
    %189 = vector.shape_cast %188 : vector<1x4x32xf32> to vector<4x32xf32>
    %190 = vector.shape_cast %183 : vector<4x32xf32> to vector<1x4x32xf32>
    tpu.vector_store %arg9[%c0_53, %c0_54, %c0_55], %190 {strides = array<i32>} : memref<1x4x32xf32, #tpu.memory_space<vmem>>, vector<1x4x32xf32>,
    %c0_56 = arith.constant 0 : index
    %c0_57 = arith.constant 0 : index
    %c0_58 = arith.constant 0 : index
    %191 = vector.load %arg10[%c0_56, %c0_57, %c0_58] : memref<1x4x32xf32, #tpu.memory_space<vmem>>, vector<1x4x32xf32>
    %192 = vector.shape_cast %191 : vector<1x4x32xf32> to vector<4x32xf32>
    %193 = vector.shape_cast %181 : vector<4x32xf32> to vector<1x4x32xf32>
    tpu.vector_store %arg10[%c0_56, %c0_57, %c0_58], %193 {strides = array<i32>} : memref<1x4x32xf32, #tpu.memory_space<vmem>>, vector<1x4x32xf32>,
    %c0_59 = arith.constant 0 : index
    %c0_60 = arith.constant 0 : index
    %194 = vector.load %arg7[%c0_59, %c0_60] : memref<1x104xf32, #tpu.memory_space<vmem>>, vector<1x64xf32>
    %c0_61 = arith.constant 0 : index
    %c64 = arith.constant 64 : index
    %195 = vector.load %arg7[%c0_61, %c64] : memref<1x104xf32, #tpu.memory_space<vmem>>, vector<1x32xf32>
    %c0_62 = arith.constant 0 : index
    %c96 = arith.constant 96 : index
    %196 = vector.load %arg7[%c0_62, %c96] : memref<1x104xf32, #tpu.memory_space<vmem>>, vector<1x8xf32>
    %197 = vector.extract_strided_slice %187 {offsets = [0, 0], sizes = [1, 64], strides = [1, 1]} : vector<4x256xf32> to vector<1x64xf32>
    %198 = arith.addf %194, %197 : vector<1x64xf32>
    %199 = vector.extract_strided_slice %187 {offsets = [1, 64], sizes = [1, 64], strides = [1, 1]} : vector<4x256xf32> to vector<1x64xf32>
    %200 = arith.addf %198, %199 : vector<1x64xf32>
    %201 = vector.extract_strided_slice %187 {offsets = [2, 128], sizes = [1, 64], strides = [1, 1]} : vector<4x256xf32> to vector<1x64xf32>
    %202 = arith.addf %200, %201 : vector<1x64xf32>
    %203 = vector.extract_strided_slice %187 {offsets = [3, 192], sizes = [1, 64], strides = [1, 1]} : vector<4x256xf32> to vector<1x64xf32>
    %204 = arith.addf %202, %203 : vector<1x64xf32>
    %205 = math.tanh %204 : vector<1x64xf32>
    %c0_63 = arith.constant 0 : index
    %c0_64 = arith.constant 0 : index
    %206 = vector.load %arg5[%c0_63, %c0_64] : memref<64x32xf32, #tpu.memory_space<vmem>>, vector<64x32xf32>
    %cst_65 = arith.constant dense<0.000000e+00> : vector<1x32xf32>
    %207 = tpu.matmul %205, %206, %cst_65 {dimension_numbers = #tpu.dot_dimension_numbers<[1], [0], [0], [1], [0, 0, 1, 1], [], []>} : vector<1x64xf32>, vector<64x32xf32>, vector<1x32xf32> -> vector<1x32xf32>
    %208 = arith.addf %207, %195 : vector<1x32xf32>
    %209 = math.tanh %208 : vector<1x32xf32>
    %c0_66 = arith.constant 0 : index
    %c0_67 = arith.constant 0 : index
    %210 = vector.load %arg6[%c0_66, %c0_67] : memref<32x8xf32, #tpu.memory_space<vmem>>, vector<32x8xf32>
    %cst_68 = arith.constant dense<0.000000e+00> : vector<1x8xf32>
    %211 = tpu.matmul %209, %210, %cst_68 {dimension_numbers = #tpu.dot_dimension_numbers<[1], [0], [0], [1], [0, 0, 1, 1], [], []>} : vector<1x32xf32>, vector<32x8xf32>, vector<1x8xf32> -> vector<1x8xf32>
    %212 = arith.addf %211, %196 : vector<1x8xf32>
    %213 = math.tanh %212 : vector<1x8xf32>
    %cst_69 = arith.constant 0.000000e+00 : f32
    %214 = vector.broadcast %cst_69 : f32 to vector<1x8xf32>
    %215 = arith.minimumf %213, %214 : vector<1x8xf32>
    %216 = math.absf %213 : vector<1x8xf32>
    %cst_70 = arith.constant 0.000000e+00 : f32
    %217 = vector.broadcast %cst_70 : f32 to vector<1x8xf32>
    %218 = arith.subf %217, %216 : vector<1x8xf32>
    %219 = math.exp %218 : vector<1x8xf32>
    %220 = math.log1p %219 : vector<1x8xf32>
    %221 = arith.subf %215, %220 : vector<1x8xf32>
    %c0_71 = arith.constant 0 : index
    %c0_72 = arith.constant 0 : index
    %222 = vector.load %arg8[%c0_71, %c0_72] : memref<1x8xf32, #tpu.memory_space<vmem>>, vector<1x8xf32>
    tpu.vector_store %arg8[%c0_71, %c0_72], %221 {strides = array<i32>} : memref<1x8xf32, #tpu.memory_space<vmem>>, vector<1x8xf32>,
    return
  }
}

</mosaic_0001>

<llo_original>
// kernel: forward.1
$region0: #{forward.1}
  #allocation0 [shape = 'u32[]', space=smem, size = 0x4, offset = 0x4, fixed_abs, tag = 'smem constant byte address 0x4 - core index']
  #allocation1 [shape = 'u32[144,128]{1,0:T(1,128)}', space=vmem, size = 0x12000, scoped, tag = 'internal scratch']
  %s0 = inlined_call_operand.vmem [shape: f32[32,8], index: 0, kind: input, shape index: {}]
  %s1 = inlined_call_operand.vmem [shape: f32[41,128], index: 1, kind: input, shape index: {}]
  %s2 = inlined_call_operand.vmem [shape: f32[1,4,32], index: 2, kind: input, shape index: {}]
  %s3 = inlined_call_operand.vmem [shape: f32[1,4,32], index: 3, kind: input, shape index: {}]
  %s4 = inlined_call_operand.hbm [shape: f32[8,32,256], index: 4, kind: input, shape index: {}]
  %s5 = inlined_call_operand.vmem [shape: f32[64,32], index: 5, kind: input, shape index: {}]
  %s6 = inlined_call_operand.vmem [shape: f32[32,8], index: 6, kind: input, shape index: {}]
  %s7 = inlined_call_operand.vmem [shape: f32[1,104], index: 7, kind: input, shape index: {}]
  %s8 = inlined_call_operand.hbm [shape: f32[1,8], index: 8, kind: output, shape index: {0}]
  %s9 = inlined_call_operand.hbm [shape: f32[1,4,32], index: 9, kind: output, shape index: {1}]
  %s10 = inlined_call_operand.hbm [shape: f32[1,4,32], index: 10, kind: output, shape index: {2}]
  %11 = xla_tuple %s8, %s9, %s10
  %s12 = sld [smem:[#allocation0]]
  $region62: #{forward.1} parent=0
    _
  %s14 = ssub.s32 1, %s12
  %s15 = scalar_select 0, %s14, %s12
  $region1: #{forward.1} parent=0
    #allocation2 [shape = 'u8[262144]{0}', space=vmem, size = 0x40000, scoped, tag = 'input window, operand 4, single buffered']
    #allocation3 [shape = 's32[1]{0}', space=sflag, size = 0x4, scoped, tag = 'scoped memory for forward.1']
    #allocation4 [shape = 's32[1]{0}', space=sflag, size = 0x4, scoped, tag = 'scoped memory for forward.1']
    #allocation5 [shape = 'u8[512]{0}', space=vmem, size = 0x400, scoped, tag = 'output window, operand 0, single buffered']
    #allocation6 [shape = 'u8[2048]{0}', space=vmem, size = 0x800, scoped, tag = 'output window, operand 1, single buffered']
    #allocation7 [shape = 's32[1]{0}', space=sflag, size = 0x4, scoped, tag = 'scoped memory for forward.1']
    #allocation8 [shape = 'u8[2048]{0}', space=vmem, size = 0x800, scoped, tag = 'output window, operand 2, single buffered']
    %16 = vsyncpa [#allocation3], 0
    %17 = vsyncpa [#allocation4], 0
    %18 = vsyncpa [#allocation7], 0
    // Predicated region
    $region2: #{forward.1} parent=1 // pred_check
      _
    $region3: #{forward.1} parent=1 // pred_check_branch
      %20 = sbr.rel (0) target = $region5
    $region4: #{forward.1} parent=1 // pred_region
      _
    $region5: #{forward.1} parent=1 // pred_fallthru
      _
    // Predicated region
    $region6: #{forward.1} parent=1 // pred_check
      _
    $region7: #{forward.1} parent=1 // pred_check_branch
      %22 = sbr.rel (0) target = $region9
    $region8: #{forward.1} parent=1 // pred_region
      _
    $region9: #{forward.1} parent=1 // pred_fallthru
      _
    // Predicated region
    $region10: #{forward.1} parent=1 // pred_check
      _
    $region11: #{forward.1} parent=1 // pred_check_branch
      %24 = sbr.rel (0) target = $region13
    $region12: #{forward.1} parent=1 // pred_region
      _
    $region13: #{forward.1} parent=1 // pred_fallthru
      _
    // Predicated region
    $region14: #{forward.1} parent=1 // pred_check
      _
    $region15: #{forward.1} parent=1 // pred_check_branch
      %26 = sbr.rel (0) target = $region17
    $region16: #{forward.1} parent=1 // pred_region
      _
    $region17: #{forward.1} parent=1 // pred_fallthru
      _
    // Predicated region
    $region18: #{forward.1} parent=1 // pred_check
      _
    $region19: #{forward.1} parent=1 // pred_check_branch
      %28 = sbr.rel (0) target = $region21
    $region20: #{forward.1} parent=1 // pred_region
      %s30 = ssub.s32 8192, 8192
      %31 = vsyncadd [#allocation3], %s30
      %s32 = sshll.u32 [#allocation2], 4
      %s33 = int_to_ptr.vmem [resolvable:$true] %s32
      %38 = dma.hbm_to_vmem [thread:$0]  %s4, 8192, %s33, [#allocation3], 256, 256, 16
    $region21: #{forward.1} parent=1 // pred_fallthru
      _
    // Predicated region
    $region22: #{forward.1} parent=1 // pred_check
      _
    $region23: #{forward.1} parent=1 // pred_check_branch
      %40 = sbr.rel (0) target = $region25
    $region24: #{forward.1} parent=1 // pred_region
      _
    $region25: #{forward.1} parent=1 // pred_fallthru
      _
    // Predicated region
    $region26: #{forward.1} parent=1 // pred_check
      _
    $region27: #{forward.1} parent=1 // pred_check_branch
      %42 = sbr.rel (0) target = $region29
    $region28: #{forward.1} parent=1 // pred_region
      _
    $region29: #{forward.1} parent=1 // pred_fallthru
      _
    // Predicated region
    $region30: #{forward.1} parent=1 // pred_check
      _
    $region31: #{forward.1} parent=1 // pred_check_branch
      %44 = sbr.rel (0) target = $region33
    $region32: #{forward.1} parent=1 // pred_region
      _
    $region33: #{forward.1} parent=1 // pred_fallthru
      _
    // Predicated region
    $region34: #{forward.1} parent=1 // pred_check
      _
    $region35: #{forward.1} parent=1 // pred_check_branch
      %46 = sbr.rel (0) target = $region37
    $region36: #{forward.1} parent=1 // pred_region
      %47 = dma.done [#allocation3], 8192
    $region37: #{forward.1} parent=1 // pred_fallthru
      _
    %v48 = vld [vmem:[%s1] sm:$0xff]
    %v49 = vld [vmem:[%s1 + $0x8] sm:$0xff]
    %v50 = vld [vmem:[%s1 + $0x10] sm:$0xff]
    %v51 = vld [vmem:[%s1 + $0x18] sm:$0xff]
    %v52 = vld [vmem:[%s1 + $0x20] sm:$0xff]
    %v53 = vld [vmem:[%s1 + $0x28] sm:$0x1]
    %v54 = vld [vmem:[%s0] sm:$0xff]
    %v55 = vld [vmem:[%s0 + $0x8] sm:$0xff]
    %v56 = vld [vmem:[%s0 + $0x10] sm:$0xff]
    %v57 = vld [vmem:[%s0 + $0x18] sm:$0xff]
    %v58 = vlaneseq
    %v59 = vshrl.u32 %v58, 7
    %v60 = vsub.s32 0, %v59
    %v61 = vrot.slane %v53, %v60
    %vm62 = vcmask 64512
    %v64 = vsel %vm62, %v54, 0
    %v67 = vsel %vm62, %v55, 0
    %v70 = vsel %vm62, %v56, 0
    %v73 = vsel %vm62, %v57, 0
    %75 = vmatprep.subr.mxu0 0.0
    %76 = vmatpush1.msra.mxu0 0.0
    %77 = vmatprep.subr.mxu0 0.0
    %78 = vmatpush1.msra.mxu0 0.0
    %79 = vmatprep.subr.mxu0 0.0
    %80 = vmatpush1.msra.mxu0 0.0
    %81 = vmatprep.subr.mxu0 0.0
    %82 = vmatpush1.msra.mxu0 0.0
    %83 = vmatprep.subr.mxu0 0.0
    %84 = vmatpush1.msra.mxu0 0.0
    %85 = vmatprep.subr.mxu0 0.0
    %86 = vmatpush1.msra.mxu0 0.0
    %87 = vmatprep.subr.mxu0 0.0
    %88 = vmatpush1.msra.mxu0 0.0
    %89 = vmatprep.subr.mxu0 0.0
    %90 = vmatpush1.msra.mxu0 0.0
    %91 = vmatprep.subr.mxu0 0.0
    %92 = vmatpush1.msra.mxu0 0.0
    %93 = vmatprep.subr.mxu0 0.0
    %94 = vmatpush1.msra.mxu0 0.0
    %95 = vmatprep.subr.mxu0 0.0
    %96 = vmatpush1.msra.mxu0 0.0
    %97 = vmatprep.subr.mxu0 0.0
    %98 = vmatpush1.msra.mxu0 0.0
    %99 = vmatprep.subr.mxu0 0.0
    %100 = vmatpush1.msra.mxu0 0.0
    %101 = vmatprep.subr.mxu0 0.0
    %102 = vmatpush1.msra.mxu0 0.0
    %103 = vmatprep.subr.mxu0 0.0
    %104 = vmatpush1.msra.mxu0 0.0
    %105 = vmatprep.subr.mxu0 0.0
    %106 = vmatpush1.msra.mxu0 %v48
    %107 = vmatprep.subr.mxu0 0.0
    %108 = vmatpush2.msra.mxu0 0.0
    %109 = vmatprep.subr.mxu0 0.0
    %110 = vmatpush2.msra.mxu0 0.0
    %111 = vmatprep.subr.mxu0 0.0
    %112 = vmatpush2.msra.mxu0 0.0
    %113 = vmatprep.subr.mxu0 0.0
    %114 = vmatpush2.msra.mxu0 0.0
    %115 = vmatprep.subr.mxu0 0.0
    %116 = vmatpush2.msra.mxu0 0.0
    %117 = vmatprep.subr.mxu0 0.0
    %118 = vmatpush2.msra.mxu0 0.0
    %119 = vmatprep.subr.mxu0 0.0
    %120 = vmatpush2.msra.mxu0 0.0
    %121 = vmatprep.subr.mxu0 0.0
    %122 = vmatpush2.msra.mxu0 0.0
    %123 = vmatprep.subr.mxu0 0.0
    %124 = vmatpush2.msra.mxu0 0.0
    %125 = vmatprep.subr.mxu0 0.0
    %126 = vmatpush2.msra.mxu0 0.0
    %127 = vmatprep.subr.mxu0 0.0
    %128 = vmatpush2.msra.mxu0 0.0
    %129 = vmatprep.subr.mxu0 0.0
    %130 = vmatpush2.msra.mxu0 0.0
    %131 = vmatprep.subr.mxu0 0.0
    %132 = vmatpush2.msra.mxu0 0.0
    %133 = vmatprep.subr.mxu0 0.0
    %134 = vmatpush2.msra.mxu0 0.0
    %135 = vmatprep.subr.mxu0 0.0
    %136 = vmatpush2.msra.mxu0 0.0
    %137 = vmatprep.subr.mxu0 0.0
    %138 = vmatpush2.msra.mxu0 0.0
    %139 = vmatprep.mubr.f32.mxu0 0.0
    %140 = vmatmul.mubr.f32.gmra.mxu0 %v64
    %v141 = vpop.f32.mrf.mxu0
    %v142 = vadd.f32 %v61, %v141
    %v143 = vpop.f32.mrf.mxu0
    %144 = vmatprep.mubr.f32.mxu0 0.0
    %145 = vmatmul.mubr.f32.gmra.mxu0 %v67
    %v146 = vpop.f32.mrf.mxu0
    %v147 = vadd.f32 %v61, %v146
    %v148 = vpop.f32.mrf.mxu0
    %149 = vmatprep.mubr.f32.mxu0 0.0
    %150 = vmatmul.mubr.f32.gmra.mxu0 %v70
    %v151 = vpop.f32.mrf.mxu0
    %v152 = vadd.f32 %v61, %v151
    %v153 = vpop.f32.mrf.mxu0
    %154 = vmatprep.mubr.f32.mxu0 0.0
    %155 = vmatmul.mubr.f32.gmra.mxu0 %v73
    %v156 = vpop.f32.mrf.mxu0
    %v157 = vadd.f32 %v61, %v156
    %v158 = vpop.f32.mrf.mxu0
    %159 = vdwg.mxu0
    %v160 = vld [vmem:[%s2] sm:$0xf]
    %v161 = vld [vmem:[%s3] sm:$0xf]
    %vm162 = vcmask 261120
    %v164 = vsel %vm162, %v160, 0
    %166 = vmatprep.subr.mxu0 0.0
    %167 = vmatpush1.msra.mxu0 0.0
    %168 = vmatprep.subr.mxu0 0.0
    %169 = vmatpush1.msra.mxu0 0.0
    %170 = vmatprep.subr.mxu0 0.0
    %171 = vmatpush1.msra.mxu0 0.0
    %172 = vmatprep.subr.mxu0 0.0
    %173 = vmatpush1.msra.mxu0 0.0
    %174 = vmatprep.subr.mxu0 0.0
    %175 = vmatpush1.msra.mxu0 0.0
    %176 = vmatprep.subr.mxu0 0.0
    %177 = vmatpush1.msra.mxu0 0.0
    %178 = vmatprep.subr.mxu0 0.0
    %179 = vmatpush1.msra.mxu0 0.0
    %180 = vmatprep.subr.mxu0 0.0
    %181 = vmatpush1.msra.mxu0 0.0
    %182 = vmatprep.subr.mxu0 0.0
    %183 = vmatpush1.msra.mxu0 0.0
    %184 = vmatprep.subr.mxu0 0.0
    %185 = vmatpush1.msra.mxu0 0.0
    %186 = vmatprep.subr.mxu0 0.0
    %187 = vmatpush1.msra.mxu0 0.0
    %188 = vmatprep.subr.mxu0 0.0
    %189 = vmatpush1.msra.mxu0 0.0
    %190 = vmatprep.subr.mxu0 0.0
    %191 = vmatpush1.msra.mxu0 %v52
    %192 = vmatprep.subr.mxu0 0.0
    %193 = vmatpush1.msra.mxu0 %v51
    %194 = vmatprep.subr.mxu0 0.0
    %195 = vmatpush1.msra.mxu0 %v50
    %196 = vmatprep.subr.mxu0 0.0
    %197 = vmatpush1.msra.mxu0 %v49
    %198 = vmatprep.subr.mxu0 0.0
    %199 = vmatpush2.msra.mxu0 0.0
    %200 = vmatprep.subr.mxu0 0.0
    %201 = vmatpush2.msra.mxu0 0.0
    %202 = vmatprep.subr.mxu0 0.0
    %203 = vmatpush2.msra.mxu0 0.0
    %204 = vmatprep.subr.mxu0 0.0
    %205 = vmatpush2.msra.mxu0 0.0
    %206 = vmatprep.subr.mxu0 0.0
    %207 = vmatpush2.msra.mxu0 0.0
    %208 = vmatprep.subr.mxu0 0.0
    %209 = vmatpush2.msra.mxu0 0.0
    %210 = vmatprep.subr.mxu0 0.0
    %211 = vmatpush2.msra.mxu0 0.0
    %212 = vmatprep.subr.mxu0 0.0
    %213 = vmatpush2.msra.mxu0 0.0
    %214 = vmatprep.subr.mxu0 0.0
    %215 = vmatpush2.msra.mxu0 0.0
    %216 = vmatprep.subr.mxu0 0.0
    %217 = vmatpush2.msra.mxu0 0.0
    %218 = vmatprep.subr.mxu0 0.0
    %219 = vmatpush2.msra.mxu0 0.0
    %220 = vmatprep.subr.mxu0 0.0
    %221 = vmatpush2.msra.mxu0 0.0
    %222 = vmatprep.subr.mxu0 0.0
    %223 = vmatpush2.msra.mxu0 0.0
    %224 = vmatprep.subr.mxu0 0.0
    %225 = vmatpush2.msra.mxu0 0.0
    %226 = vmatprep.subr.mxu0 0.0
    %227 = vmatpush2.msra.mxu0 0.0
    %228 = vmatprep.subr.mxu0 0.0
    %229 = vmatpush2.msra.mxu0 0.0
    %230 = vmatprep.mubr.f32.mxu0 0.0
    %231 = vmatmul.mubr.f32.gmra.mxu0 %v164
    %v232 = vpop.f32.mrf.mxu0
    %v233 = vadd.f32 0.0, %v232
    %v234 = vpop.f32.mrf.mxu0
    %235 = vdwg.mxu0
    %v236 = vadd.f32 %v142, %v233
    %v237 = vxor.u32 %v236, 2147483648
    %v238 = vmul.f32 %v237, 1.442695
    %v239 = vpow.pop %v238
    %v240 = vadd.f32 %v239, 1.0
    %v241 = vrcp.pop %v240
    %v242 = vmul.f32 1.0, %v241
    %v243 = vtanh.pop %v236
    %245 = vrot.lane.b32.xlu0 %v161, 32
    %v246 = vpop.permute.xlu0 %245
    %v248 = vmul.f32 %v242, %v246
    %250 = vrot.lane.b32.xlu0 %v243, 64
    %v251 = vpop.permute.xlu0 %250
    %v253 = vmul.f32 %v242, %v251
    %255 = vrot.lane.b32.xlu0 %v253, 32
    %v256 = vpop.permute.xlu0 %255
    %v258 = vadd.f32 %v248, %v256
    %v259 = vtanh.pop %v258
    %261 = vrot.lane.b32.xlu0 %v259, 64
    %v262 = vpop.permute.xlu0 %261
    %v264 = vmul.f32 %v242, %v262
    %v265 = vld [vmem:[#allocation2] sm:$0xff]
    %v266 = vld [vmem:[#allocation2 + $0x8] sm:$0xff]
    %v267 = vld [vmem:[#allocation2 + $0x10] sm:$0xff]
    %v268 = vld [vmem:[#allocation2 + $0x18] sm:$0xff]
    %v269 = vld [vmem:[#allocation2 + $0x20] sm:$0xff]
    %v270 = vld [vmem:[#allocation2 + $0x28] sm:$0xff]
    %v271 = vld [vmem:[#allocation2 + $0x30] sm:$0xff]
    %v272 = vld [vmem:[#allocation2 + $0x38] sm:$0xff]
    %274 = vrot.lane.b32.xlu0 %v264, 32
    %v275 = vpop.permute.xlu0 %274
    %v276 = vsel %vm162, %v275, 0
    %278 = vmatprep.subr.mxu0 0.0
    %279 = vmatpush1.msra.mxu0 0.0
    %280 = vmatprep.subr.mxu0 0.0
    %281 = vmatpush1.msra.mxu0 0.0
    %282 = vmatprep.subr.mxu0 0.0
    %283 = vmatpush1.msra.mxu0 0.0
    %284 = vmatprep.subr.mxu0 0.0
    %285 = vmatpush1.msra.mxu0 0.0
    %286 = vmatprep.subr.mxu0 0.0
    %287 = vmatpush1.msra.mxu0 0.0
    %288 = vmatprep.subr.mxu0 0.0
    %289 = vmatpush1.msra.mxu0 0.0
    %290 = vmatprep.subr.mxu0 0.0
    %291 = vmatpush1.msra.mxu0 0.0
    %292 = vmatprep.subr.mxu0 0.0
    %293 = vmatpush1.msra.mxu0 0.0
    %294 = vmatprep.subr.mxu0 0.0
    %295 = vmatpush1.msra.mxu0 0.0
    %296 = vmatprep.subr.mxu0 0.0
    %297 = vmatpush1.msra.mxu0 0.0
    %298 = vmatprep.subr.mxu0 0.0
    %299 = vmatpush1.msra.mxu0 0.0
    %300 = vmatprep.subr.mxu0 0.0
    %301 = vmatpush1.msra.mxu0 0.0
    %302 = vmatprep.subr.mxu0 0.0
    %303 = vmatpush1.msra.mxu0 %v52
    %304 = vmatprep.subr.mxu0 0.0
    %305 = vmatpush1.msra.mxu0 %v51
    %306 = vmatprep.subr.mxu0 0.0
    %307 = vmatpush1.msra.mxu0 %v50
    %308 = vmatprep.subr.mxu0 0.0
    %309 = vmatpush1.msra.mxu0 %v49
    %310 = vmatprep.subr.mxu0 0.0
    %311 = vmatpush2.msra.mxu0 0.0
    %312 = vmatprep.subr.mxu0 0.0
    %313 = vmatpush2.msra.mxu0 0.0
    %314 = vmatprep.subr.mxu0 0.0
    %315 = vmatpush2.msra.mxu0 0.0
    %316 = vmatprep.subr.mxu0 0.0
    %317 = vmatpush2.msra.mxu0 0.0
    %318 = vmatprep.subr.mxu0 0.0
    %319 = vmatpush2.msra.mxu0 0.0
    %320 = vmatprep.subr.mxu0 0.0
    %321 = vmatpush2.msra.mxu0 0.0
    %322 = vmatprep.subr.mxu0 0.0
    %323 = vmatpush2.msra.mxu0 0.0
    %324 = vmatprep.subr.mxu0 0.0
    %325 = vmatpush2.msra.mxu0 0.0
    %326 = vmatprep.subr.mxu0 0.0
    %327 = vmatpush2.msra.mxu0 0.0
    %328 = vmatprep.subr.mxu0 0.0
    %329 = vmatpush2.msra.mxu0 0.0
    %330 = vmatprep.subr.mxu0 0.0
    %331 = vmatpush2.msra.mxu0 0.0
    %332 = vmatprep.subr.mxu0 0.0
    %333 = vmatpush2.msra.mxu0 0.0
    %334 = vmatprep.subr.mxu0 0.0
    %335 = vmatpush2.msra.mxu0 0.0
    %336 = vmatprep.subr.mxu0 0.0
    %337 = vmatpush2.msra.mxu0 0.0
    %338 = vmatprep.subr.mxu0 0.0
    %339 = vmatpush2.msra.mxu0 0.0
    %340 = vmatprep.subr.mxu0 0.0
    %341 = vmatpush2.msra.mxu0 0.0
    %342 = vmatprep.mubr.f32.mxu0 0.0
    %343 = vmatmul.mubr.f32.gmra.mxu0 %v276
    %v344 = vpop.f32.mrf.mxu0
    %v345 = vadd.f32 0.0, %v344
    %v346 = vpop.f32.mrf.mxu0
    %347 = vdwg.mxu0
    %v349 = vrot.slane %v345, 4
    %v351 = vadd.f32 %v142, %v349
    %v352 = vxor.u32 %v351, 2147483648
    %v353 = vmul.f32 %v352, 1.442695
    %v354 = vpow.pop %v353
    %v355 = vadd.f32 %v354, 1.0
    %v356 = vrcp.pop %v355
    %v357 = vmul.f32 1.0, %v356
    %v358 = vtanh.pop %v351
    %v360 = vrot.slane %v258, 4
    %v362 = vmul.f32 %v357, %v360
    %364 = vrot.lane.b32.xlu0 %v358, 64
    %v365 = vpop.permute.xlu0 %364
    %v367 = vmul.f32 %v357, %v365
    %369 = vrot.lane.b32.xlu0 %v367, 32
    %v370 = vpop.permute.xlu0 %369
    %v372 = vadd.f32 %v362, %v370
    %v373 = vtanh.pop %v372
    %375 = vrot.lane.b32.xlu0 %v373, 64
    %v376 = vpop.permute.xlu0 %375
    %v378 = vmul.f32 %v357, %v376
    %s379 = scalar_lea.vmem [#allocation2], 64
    %v380 = vld [vmem:[%s379] sm:$0xff]
    %v381 = vld [vmem:[%s379 + $0x8] sm:$0xff]
    %v382 = vld [vmem:[%s379 + $0x10] sm:$0xff]
    %v383 = vld [vmem:[%s379 + $0x18] sm:$0xff]
    %v384 = vld [vmem:[%s379 + $0x20] sm:$0xff]
    %v385 = vld [vmem:[%s379 + $0x28] sm:$0xff]
    %v386 = vld [vmem:[%s379 + $0x30] sm:$0xff]
    %v387 = vld [vmem:[%s379 + $0x38] sm:$0xff]
    %v389 = vrot.slane %v378, 4
    %390 = vrot.lane.b32.xlu0 %v389, 32
    %v391 = vpop.permute.xlu0 %390
    %v392 = vsel %vm162, %v391, 0
    %394 = vmatprep.subr.mxu0 0.0
    %395 = vmatpush1.msra.mxu0 0.0
    %396 = vmatprep.subr.mxu0 0.0
    %397 = vmatpush1.msra.mxu0 0.0
    %398 = vmatprep.subr.mxu0 0.0
    %399 = vmatpush1.msra.mxu0 0.0
    %400 = vmatprep.subr.mxu0 0.0
    %401 = vmatpush1.msra.mxu0 0.0
    %402 = vmatprep.subr.mxu0 0.0
    %403 = vmatpush1.msra.mxu0 0.0
    %404 = vmatprep.subr.mxu0 0.0
    %405 = vmatpush1.msra.mxu0 0.0
    %406 = vmatprep.subr.mxu0 0.0
    %407 = vmatpush1.msra.mxu0 0.0
    %408 = vmatprep.subr.mxu0 0.0
    %409 = vmatpush1.msra.mxu0 0.0
    %410 = vmatprep.subr.mxu0 0.0
    %411 = vmatpush1.msra.mxu0 0.0
    %412 = vmatprep.subr.mxu0 0.0
    %413 = vmatpush1.msra.mxu0 0.0
    %414 = vmatprep.subr.mxu0 0.0
    %415 = vmatpush1.msra.mxu0 0.0
    %416 = vmatprep.subr.mxu0 0.0
    %417 = vmatpush1.msra.mxu0 0.0
    %418 = vmatprep.subr.mxu0 %v387
    %419 = vmatpush1.msra.mxu0 %v386
    %420 = vmatprep.subr.mxu0 %v385
    %421 = vmatpush1.msra.mxu0 %v384
    %422 = vmatprep.subr.mxu0 %v383
    %423 = vmatpush1.msra.mxu0 %v382
    %424 = vmatprep.subr.mxu0 %v381
    %425 = vmatpush1.msra.mxu0 %v380
    %426 = vmatprep.subr.mxu0 0.0
    %427 = vmatpush2.msra.mxu0 0.0
    %428 = vmatprep.subr.mxu0 0.0
    %429 = vmatpush2.msra.mxu0 0.0
    %430 = vmatprep.subr.mxu0 0.0
    %431 = vmatpush2.msra.mxu0 0.0
    %432 = vmatprep.subr.mxu0 0.0
    %433 = vmatpush2.msra.mxu0 0.0
    %434 = vmatprep.subr.mxu0 0.0
    %435 = vmatpush2.msra.mxu0 0.0
    %436 = vmatprep.subr.mxu0 0.0
    %437 = vmatpush2.msra.mxu0 0.0
    %438 = vmatprep.subr.mxu0 0.0
    %439 = vmatpush2.msra.mxu0 0.0
    %440 = vmatprep.subr.mxu0 0.0
    %441 = vmatpush2.msra.mxu0 0.0
    %442 = vmatprep.subr.mxu0 0.0
    %443 = vmatpush2.msra.mxu0 0.0
    %444 = vmatprep.subr.mxu0 0.0
    %445 = vmatpush2.msra.mxu0 0.0
    %446 = vmatprep.subr.mxu0 0.0
    %447 = vmatpush2.msra.mxu0 0.0
    %448 = vmatprep.subr.mxu0 0.0
    %449 = vmatpush2.msra.mxu0 0.0
    %450 = vmatprep.subr.mxu0 0.0
    %451 = vmatpush2.msra.mxu0 0.0
    %452 = vmatprep.subr.mxu0 0.0
    %453 = vmatpush2.msra.mxu0 0.0
    %454 = vmatprep.subr.mxu0 0.0
    %455 = vmatpush2.msra.mxu0 0.0
    %456 = vmatprep.subr.mxu0 0.0
    %457 = vmatpush2.msra.mxu0 0.0
    %458 = vmatprep.mubr.f32.mxu0 0.0
    %459 = vmatmul.mubr.f32.gmra.mxu0 %v392
    %v460 = vpop.f32.mrf.mxu0
    %v461 = vadd.f32 0.0, %v460
    %v462 = vpop.f32.mrf.mxu0
    %v463 = vadd.f32 0.0, %v462
    %464 = vdwg.mxu0
    %465 = vmatprep.subr.mxu0 0.0
    %466 = vmatpush1.msra.mxu0 0.0
    %467 = vmatprep.subr.mxu0 0.0
    %468 = vmatpush1.msra.mxu0 0.0
    %469 = vmatprep.subr.mxu0 0.0
    %470 = vmatpush1.msra.mxu0 0.0
    %471 = vmatprep.subr.mxu0 0.0
    %472 = vmatpush1.msra.mxu0 0.0
    %473 = vmatprep.subr.mxu0 0.0
    %474 = vmatpush1.msra.mxu0 0.0
    %475 = vmatprep.subr.mxu0 0.0
    %476 = vmatpush1.msra.mxu0 0.0
    %477 = vmatprep.subr.mxu0 0.0
    %478 = vmatpush1.msra.mxu0 0.0
    %479 = vmatprep.subr.mxu0 0.0
    %480 = vmatpush1.msra.mxu0 0.0
    %481 = vmatprep.subr.mxu0 0.0
    %482 = vmatpush1.msra.mxu0 0.0
    %483 = vmatprep.subr.mxu0 0.0
    %484 = vmatpush1.msra.mxu0 0.0
    %485 = vmatprep.subr.mxu0 0.0
    %486 = vmatpush1.msra.mxu0 0.0
    %487 = vmatprep.subr.mxu0 0.0
    %488 = vmatpush1.msra.mxu0 0.0
    %489 = vmatprep.subr.mxu0 %v272
    %490 = vmatpush1.msra.mxu0 %v271
    %491 = vmatprep.subr.mxu0 %v270
    %492 = vmatpush1.msra.mxu0 %v269
    %493 = vmatprep.subr.mxu0 %v268
    %494 = vmatpush1.msra.mxu0 %v267
    %495 = vmatprep.subr.mxu0 %v266
    %496 = vmatpush1.msra.mxu0 %v265
    %497 = vmatprep.subr.mxu0 0.0
    %498 = vmatpush2.msra.mxu0 0.0
    %499 = vmatprep.subr.mxu0 0.0
    %500 = vmatpush2.msra.mxu0 0.0
    %501 = vmatprep.subr.mxu0 0.0
    %502 = vmatpush2.msra.mxu0 0.0
    %503 = vmatprep.subr.mxu0 0.0
    %504 = vmatpush2.msra.mxu0 0.0
    %505 = vmatprep.subr.mxu0 0.0
    %506 = vmatpush2.msra.mxu0 0.0
    %507 = vmatprep.subr.mxu0 0.0
    %508 = vmatpush2.msra.mxu0 0.0
    %509 = vmatprep.subr.mxu0 0.0
    %510 = vmatpush2.msra.mxu0 0.0
    %511 = vmatprep.subr.mxu0 0.0
    %512 = vmatpush2.msra.mxu0 0.0
    %513 = vmatprep.subr.mxu0 0.0
    %514 = vmatpush2.msra.mxu0 0.0
    %515 = vmatprep.subr.mxu0 0.0
    %516 = vmatpush2.msra.mxu0 0.0
    %517 = vmatprep.subr.mxu0 0.0
    %518 = vmatpush2.msra.mxu0 0.0
    %519 = vmatprep.subr.mxu0 0.0
    %520 = vmatpush2.msra.mxu0 0.0
    %521 = vmatprep.subr.mxu0 0.0
    %522 = vmatpush2.msra.mxu0 0.0
    %523 = vmatprep.subr.mxu0 0.0
    %524 = vmatpush2.msra.mxu0 0.0
    %525 = vmatprep.subr.mxu0 0.0
    %526 = vmatpush2.msra.mxu0 0.0
    %527 = vmatprep.subr.mxu0 0.0
    %528 = vmatpush2.msra.mxu0 0.0
    %529 = vmatprep.mubr.f32.mxu0 0.0
    %530 = vmatmul.mubr.f32.gmra.mxu0 %v276
    %v531 = vpop.f32.mrf.mxu0
    %v532 = vadd.f32 %v461, %v531
    %v533 = vpop.f32.mrf.mxu0
    %v534 = vadd.f32 %v463, %v533
    %535 = vdwg.mxu0
    %536 = vmatprep.subr.mxu0 0.0
    %537 = vmatpush1.msra.mxu0 0.0
    %538 = vmatprep.subr.mxu0 0.0
    %539 = vmatpush1.msra.mxu0 0.0
    %540 = vmatprep.subr.mxu0 0.0
    %541 = vmatpush1.msra.mxu0 0.0
    %542 = vmatprep.subr.mxu0 0.0
    %543 = vmatpush1.msra.mxu0 0.0
    %544 = vmatprep.subr.mxu0 0.0
    %545 = vmatpush1.msra.mxu0 0.0
    %546 = vmatprep.subr.mxu0 0.0
    %547 = vmatpush1.msra.mxu0 0.0
    %548 = vmatprep.subr.mxu0 0.0
    %549 = vmatpush1.msra.mxu0 0.0
    %550 = vmatprep.subr.mxu0 0.0
    %551 = vmatpush1.msra.mxu0 0.0
    %552 = vmatprep.subr.mxu0 0.0
    %553 = vmatpush1.msra.mxu0 0.0
    %554 = vmatprep.subr.mxu0 0.0
    %555 = vmatpush1.msra.mxu0 0.0
    %556 = vmatprep.subr.mxu0 0.0
    %557 = vmatpush1.msra.mxu0 0.0
    %558 = vmatprep.subr.mxu0 0.0
    %559 = vmatpush1.msra.mxu0 0.0
    %560 = vmatprep.subr.mxu0 0.0
    %561 = vmatpush1.msra.mxu0 %v52
    %562 = vmatprep.subr.mxu0 0.0
    %563 = vmatpush1.msra.mxu0 %v51
    %564 = vmatprep.subr.mxu0 0.0
    %565 = vmatpush1.msra.mxu0 %v50
    %566 = vmatprep.subr.mxu0 0.0
    %567 = vmatpush1.msra.mxu0 %v49
    %568 = vmatprep.subr.mxu0 0.0
    %569 = vmatpush2.msra.mxu0 0.0
    %570 = vmatprep.subr.mxu0 0.0
    %571 = vmatpush2.msra.mxu0 0.0
    %572 = vmatprep.subr.mxu0 0.0
    %573 = vmatpush2.msra.mxu0 0.0
    %574 = vmatprep.subr.mxu0 0.0
    %575 = vmatpush2.msra.mxu0 0.0
    %576 = vmatprep.subr.mxu0 0.0
    %577 = vmatpush2.msra.mxu0 0.0
    %578 = vmatprep.subr.mxu0 0.0
    %579 = vmatpush2.msra.mxu0 0.0
    %580 = vmatprep.subr.mxu0 0.0
    %581 = vmatpush2.msra.mxu0 0.0
    %582 = vmatprep.subr.mxu0 0.0
    %583 = vmatpush2.msra.mxu0 0.0
    %584 = vmatprep.subr.mxu0 0.0
    %585 = vmatpush2.msra.mxu0 0.0
    %586 = vmatprep.subr.mxu0 0.0
    %587 = vmatpush2.msra.mxu0 0.0
    %588 = vmatprep.subr.mxu0 0.0
    %589 = vmatpush2.msra.mxu0 0.0
    %590 = vmatprep.subr.mxu0 0.0
    %591 = vmatpush2.msra.mxu0 0.0
    %592 = vmatprep.subr.mxu0 0.0
    %593 = vmatpush2.msra.mxu0 0.0
    %594 = vmatprep.subr.mxu0 0.0
    %595 = vmatpush2.msra.mxu0 0.0
    %596 = vmatprep.subr.mxu0 0.0
    %597 = vmatpush2.msra.mxu0 0.0
    %598 = vmatprep.subr.mxu0 0.0
    %599 = vmatpush2.msra.mxu0 0.0
    %600 = vmatprep.mubr.f32.mxu0 0.0
    %601 = vmatmul.mubr.f32.gmra.mxu0 %v392
    %v602 = vpop.f32.mrf.mxu0
    %v603 = vadd.f32 0.0, %v602
    %v604 = vpop.f32.mrf.mxu0
    %605 = vdwg.mxu0
    %v606 = vadd.f32 %v147, %v603
    %v607 = vxor.u32 %v606, 2147483648
    %v608 = vmul.f32 %v607, 1.442695
    %v609 = vpow.pop %v608
    %v610 = vadd.f32 %v609, 1.0
    %v611 = vrcp.pop %v610
    %v612 = vmul.f32 1.0, %v611
    %v613 = vtanh.pop %v606
    %v615 = vrot.slane %v372, 4
    %v617 = vmul.f32 %v612, %v615
    %619 = vrot.lane.b32.xlu0 %v613, 64
    %v620 = vpop.permute.xlu0 %619
    %v622 = vmul.f32 %v612, %v620
    %624 = vrot.lane.b32.xlu0 %v622, 32
    %v625 = vpop.permute.xlu0 %624
    %v627 = vadd.f32 %v617, %v625
    %v628 = vtanh.pop %v627
    %630 = vrot.lane.b32.xlu0 %v628, 64
    %v631 = vpop.permute.xlu0 %630
    %v633 = vmul.f32 %v612, %v631
    %s634 = scalar_lea.vmem [#allocation2], 128
    %v635 = vld [vmem:[%s634] sm:$0xff]
    %v636 = vld [vmem:[%s634 + $0x8] sm:$0xff]
    %v637 = vld [vmem:[%s634 + $0x10] sm:$0xff]
    %v638 = vld [vmem:[%s634 + $0x18] sm:$0xff]
    %v639 = vld [vmem:[%s634 + $0x20] sm:$0xff]
    %v640 = vld [vmem:[%s634 + $0x28] sm:$0xff]
    %v641 = vld [vmem:[%s634 + $0x30] sm:$0xff]
    %v642 = vld [vmem:[%s634 + $0x38] sm:$0xff]
    %644 = vrot.lane.b32.xlu0 %v633, 32
    %v645 = vpop.permute.xlu0 %644
    %v646 = vsel %vm162, %v645, 0
    %648 = vmatprep.subr.mxu0 0.0
    %649 = vmatpush1.msra.mxu0 0.0
    %650 = vmatprep.subr.mxu0 0.0
    %651 = vmatpush1.msra.mxu0 0.0
    %652 = vmatprep.subr.mxu0 0.0
    %653 = vmatpush1.msra.mxu0 0.0
    %654 = vmatprep.subr.mxu0 0.0
    %655 = vmatpush1.msra.mxu0 0.0
    %656 = vmatprep.subr.mxu0 0.0
    %657 = vmatpush1.msra.mxu0 0.0
    %658 = vmatprep.subr.mxu0 0.0
    %659 = vmatpush1.msra.mxu0 0.0
    %660 = vmatprep.subr.mxu0 0.0
    %661 = vmatpush1.msra.mxu0 0.0
    %662 = vmatprep.subr.mxu0 0.0
    %663 = vmatpush1.msra.mxu0 0.0
    %664 = vmatprep.subr.mxu0 0.0
    %665 = vmatpush1.msra.mxu0 0.0
    %666 = vmatprep.subr.mxu0 0.0
    %667 = vmatpush1.msra.mxu0 0.0
    %668 = vmatprep.subr.mxu0 0.0
    %669 = vmatpush1.msra.mxu0 0.0
    %670 = vmatprep.subr.mxu0 0.0
    %671 = vmatpush1.msra.mxu0 0.0
    %672 = vmatprep.subr.mxu0 %v642
    %673 = vmatpush1.msra.mxu0 %v641
    %674 = vmatprep.subr.mxu0 %v640
    %675 = vmatpush1.msra.mxu0 %v639
    %676 = vmatprep.subr.mxu0 %v638
    %677 = vmatpush1.msra.mxu0 %v637
    %678 = vmatprep.subr.mxu0 %v636
    %679 = vmatpush1.msra.mxu0 %v635
    %680 = vmatprep.subr.mxu0 0.0
    %681 = vmatpush2.msra.mxu0 0.0
    %682 = vmatprep.subr.mxu0 0.0
    %683 = vmatpush2.msra.mxu0 0.0
    %684 = vmatprep.subr.mxu0 0.0
    %685 = vmatpush2.msra.mxu0 0.0
    %686 = vmatprep.subr.mxu0 0.0
    %687 = vmatpush2.msra.mxu0 0.0
    %688 = vmatprep.subr.mxu0 0.0
    %689 = vmatpush2.msra.mxu0 0.0
    %690 = vmatprep.subr.mxu0 0.0
    %691 = vmatpush2.msra.mxu0 0.0
    %692 = vmatprep.subr.mxu0 0.0
    %693 = vmatpush2.msra.mxu0 0.0
    %694 = vmatprep.subr.mxu0 0.0
    %695 = vmatpush2.msra.mxu0 0.0
    %696 = vmatprep.subr.mxu0 0.0
    %697 = vmatpush2.msra.mxu0 0.0
    %698 = vmatprep.subr.mxu0 0.0
    %699 = vmatpush2.msra.mxu0 0.0
    %700 = vmatprep.subr.mxu0 0.0
    %701 = vmatpush2.msra.mxu0 0.0
    %702 = vmatprep.subr.mxu0 0.0
    %703 = vmatpush2.msra.mxu0 0.0
    %704 = vmatprep.subr.mxu0 0.0
    %705 = vmatpush2.msra.mxu0 0.0
    %706 = vmatprep.subr.mxu0 0.0
    %707 = vmatpush2.msra.mxu0 0.0
    %708 = vmatprep.subr.mxu0 0.0
    %709 = vmatpush2.msra.mxu0 0.0
    %710 = vmatprep.subr.mxu0 0.0
    %711 = vmatpush2.msra.mxu0 0.0
    %712 = vmatprep.mubr.f32.mxu0 0.0
    %713 = vmatmul.mubr.f32.gmra.mxu0 %v646
    %v714 = vpop.f32.mrf.mxu0
    %v715 = vadd.f32 0.0, %v714
    %v716 = vpop.f32.mrf.mxu0
    %v717 = vadd.f32 0.0, %v716
    %718 = vdwg.mxu0
    %v719 = vadd.f32 %v532, %v715
    %v720 = vadd.f32 %v534, %v717
    %721 = vmatprep.subr.mxu0 0.0
    %722 = vmatpush1.msra.mxu0 0.0
    %723 = vmatprep.subr.mxu0 0.0
    %724 = vmatpush1.msra.mxu0 0.0
    %725 = vmatprep.subr.mxu0 0.0
    %726 = vmatpush1.msra.mxu0 0.0
    %727 = vmatprep.subr.mxu0 0.0
    %728 = vmatpush1.msra.mxu0 0.0
    %729 = vmatprep.subr.mxu0 0.0
    %730 = vmatpush1.msra.mxu0 0.0
    %731 = vmatprep.subr.mxu0 0.0
    %732 = vmatpush1.msra.mxu0 0.0
    %733 = vmatprep.subr.mxu0 0.0
    %734 = vmatpush1.msra.mxu0 0.0
    %735 = vmatprep.subr.mxu0 0.0
    %736 = vmatpush1.msra.mxu0 0.0
    %737 = vmatprep.subr.mxu0 0.0
    %738 = vmatpush1.msra.mxu0 0.0
    %739 = vmatprep.subr.mxu0 0.0
    %740 = vmatpush1.msra.mxu0 0.0
    %741 = vmatprep.subr.mxu0 0.0
    %742 = vmatpush1.msra.mxu0 0.0
    %743 = vmatprep.subr.mxu0 0.0
    %744 = vmatpush1.msra.mxu0 0.0
    %745 = vmatprep.subr.mxu0 0.0
    %746 = vmatpush1.msra.mxu0 %v52
    %747 = vmatprep.subr.mxu0 0.0
    %748 = vmatpush1.msra.mxu0 %v51
    %749 = vmatprep.subr.mxu0 0.0
    %750 = vmatpush1.msra.mxu0 %v50
    %751 = vmatprep.subr.mxu0 0.0
    %752 = vmatpush1.msra.mxu0 %v49
    %753 = vmatprep.subr.mxu0 0.0
    %754 = vmatpush2.msra.mxu0 0.0
    %755 = vmatprep.subr.mxu0 0.0
    %756 = vmatpush2.msra.mxu0 0.0
    %757 = vmatprep.subr.mxu0 0.0
    %758 = vmatpush2.msra.mxu0 0.0
    %759 = vmatprep.subr.mxu0 0.0
    %760 = vmatpush2.msra.mxu0 0.0
    %761 = vmatprep.subr.mxu0 0.0
    %762 = vmatpush2.msra.mxu0 0.0
    %763 = vmatprep.subr.mxu0 0.0
    %764 = vmatpush2.msra.mxu0 0.0
    %765 = vmatprep.subr.mxu0 0.0
    %766 = vmatpush2.msra.mxu0 0.0
    %767 = vmatprep.subr.mxu0 0.0
    %768 = vmatpush2.msra.mxu0 0.0
    %769 = vmatprep.subr.mxu0 0.0
    %770 = vmatpush2.msra.mxu0 0.0
    %771 = vmatprep.subr.mxu0 0.0
    %772 = vmatpush2.msra.mxu0 0.0
    %773 = vmatprep.subr.mxu0 0.0
    %774 = vmatpush2.msra.mxu0 0.0
    %775 = vmatprep.subr.mxu0 0.0
    %776 = vmatpush2.msra.mxu0 0.0
    %777 = vmatprep.subr.mxu0 0.0
    %778 = vmatpush2.msra.mxu0 0.0
    %779 = vmatprep.subr.mxu0 0.0
    %780 = vmatpush2.msra.mxu0 0.0
    %781 = vmatprep.subr.mxu0 0.0
    %782 = vmatpush2.msra.mxu0 0.0
    %783 = vmatprep.subr.mxu0 0.0
    %784 = vmatpush2.msra.mxu0 0.0
    %785 = vmatprep.mubr.f32.mxu0 0.0
    %786 = vmatmul.mubr.f32.gmra.mxu0 %v646
    %v787 = vpop.f32.mrf.mxu0
    %v788 = vadd.f32 0.0, %v787
    %v789 = vpop.f32.mrf.mxu0
    %790 = vdwg.mxu0
    %v792 = vrot.slane %v788, 4
    %v794 = vadd.f32 %v147, %v792
    %v795 = vxor.u32 %v794, 2147483648
    %v796 = vmul.f32 %v795, 1.442695
    %v797 = vpow.pop %v796
    %v798 = vadd.f32 %v797, 1.0
    %v799 = vrcp.pop %v798
    %v800 = vmul.f32 1.0, %v799
    %v801 = vtanh.pop %v794
    %v803 = vrot.slane %v627, 4
    %v805 = vmul.f32 %v800, %v803
    %807 = vrot.lane.b32.xlu0 %v801, 64
    %v808 = vpop.permute.xlu0 %807
    %v810 = vmul.f32 %v800, %v808
    %812 = vrot.lane.b32.xlu0 %v810, 32
    %v813 = vpop.permute.xlu0 %812
    %v815 = vadd.f32 %v805, %v813
    %v816 = vtanh.pop %v815
    %818 = vrot.lane.b32.xlu0 %v816, 64
    %v819 = vpop.permute.xlu0 %818
    %v821 = vmul.f32 %v800, %v819
    %s822 = scalar_lea.vmem [#allocation2], 192
    %v823 = vld [vmem:[%s822] sm:$0xff]
    %v824 = vld [vmem:[%s822 + $0x8] sm:$0xff]
    %v825 = vld [vmem:[%s822 + $0x10] sm:$0xff]
    %v826 = vld [vmem:[%s822 + $0x18] sm:$0xff]
    %v827 = vld [vmem:[%s822 + $0x20] sm:$0xff]
    %v828 = vld [vmem:[%s822 + $0x28] sm:$0xff]
    %v829 = vld [vmem:[%s822 + $0x30] sm:$0xff]
    %v830 = vld [vmem:[%s822 + $0x38] sm:$0xff]
    %v832 = vrot.slane %v821, 4
    %833 = vrot.lane.b32.xlu0 %v832, 32
    %v834 = vpop.permute.xlu0 %833
    %v835 = vsel %vm162, %v834, 0
    %837 = vmatprep.subr.mxu0 0.0
    %838 = vmatpush1.msra.mxu0 0.0
    %839 = vmatprep.subr.mxu0 0.0
    %840 = vmatpush1.msra.mxu0 0.0
    %841 = vmatprep.subr.mxu0 0.0
    %842 = vmatpush1.msra.mxu0 0.0
    %843 = vmatprep.subr.mxu0 0.0
    %844 = vmatpush1.msra.mxu0 0.0
    %845 = vmatprep.subr.mxu0 0.0
    %846 = vmatpush1.msra.mxu0 0.0
    %847 = vmatprep.subr.mxu0 0.0
    %848 = vmatpush1.msra.mxu0 0.0
    %849 = vmatprep.subr.mxu0 0.0
    %850 = vmatpush1.msra.mxu0 0.0
    %851 = vmatprep.subr.mxu0 0.0
    %852 = vmatpush1.msra.mxu0 0.0
    %853 = vmatprep.subr.mxu0 0.0
    %854 = vmatpush1.msra.mxu0 0.0
    %855 = vmatprep.subr.mxu0 0.0
    %856 = vmatpush1.msra.mxu0 0.0
    %857 = vmatprep.subr.mxu0 0.0
    %858 = vmatpush1.msra.mxu0 0.0
    %859 = vmatprep.subr.mxu0 0.0
    %860 = vmatpush1.msra.mxu0 0.0
    %861 = vmatprep.subr.mxu0 %v830
    %862 = vmatpush1.msra.mxu0 %v829
    %863 = vmatprep.subr.mxu0 %v828
    %864 = vmatpush1.msra.mxu0 %v827
    %865 = vmatprep.subr.mxu0 %v826
    %866 = vmatpush1.msra.mxu0 %v825
    %867 = vmatprep.subr.mxu0 %v824
    %868 = vmatpush1.msra.mxu0 %v823
    %869 = vmatprep.subr.mxu0 0.0
    %870 = vmatpush2.msra.mxu0 0.0
    %871 = vmatprep.subr.mxu0 0.0
    %872 = vmatpush2.msra.mxu0 0.0
    %873 = vmatprep.subr.mxu0 0.0
    %874 = vmatpush2.msra.mxu0 0.0
    %875 = vmatprep.subr.mxu0 0.0
    %876 = vmatpush2.msra.mxu0 0.0
    %877 = vmatprep.subr.mxu0 0.0
    %878 = vmatpush2.msra.mxu0 0.0
    %879 = vmatprep.subr.mxu0 0.0
    %880 = vmatpush2.msra.mxu0 0.0
    %881 = vmatprep.subr.mxu0 0.0
    %882 = vmatpush2.msra.mxu0 0.0
    %883 = vmatprep.subr.mxu0 0.0
    %884 = vmatpush2.msra.mxu0 0.0
    %885 = vmatprep.subr.mxu0 0.0
    %886 = vmatpush2.msra.mxu0 0.0
    %887 = vmatprep.subr.mxu0 0.0
    %888 = vmatpush2.msra.mxu0 0.0
    %889 = vmatprep.subr.mxu0 0.0
    %890 = vmatpush2.msra.mxu0 0.0
    %891 = vmatprep.subr.mxu0 0.0
    %892 = vmatpush2.msra.mxu0 0.0
    %893 = vmatprep.subr.mxu0 0.0
    %894 = vmatpush2.msra.mxu0 0.0
    %895 = vmatprep.subr.mxu0 0.0
    %896 = vmatpush2.msra.mxu0 0.0
    %897 = vmatprep.subr.mxu0 0.0
    %898 = vmatpush2.msra.mxu0 0.0
    %899 = vmatprep.subr.mxu0 0.0
    %900 = vmatpush2.msra.mxu0 0.0
    %901 = vmatprep.mubr.f32.mxu0 0.0
    %902 = vmatmul.mubr.f32.gmra.mxu0 %v835
    %v903 = vpop.f32.mrf.mxu0
    %v904 = vadd.f32 0.0, %v903
    %v905 = vpop.f32.mrf.mxu0
    %v906 = vadd.f32 0.0, %v905
    %907 = vdwg.mxu0
    %v908 = vadd.f32 %v719, %v904
    %v909 = vadd.f32 %v720, %v906
    %910 = vmatprep.subr.mxu0 0.0
    %911 = vmatpush1.msra.mxu0 0.0
    %912 = vmatprep.subr.mxu0 0.0
    %913 = vmatpush1.msra.mxu0 0.0
    %914 = vmatprep.subr.mxu0 0.0
    %915 = vmatpush1.msra.mxu0 0.0
    %916 = vmatprep.subr.mxu0 0.0
    %917 = vmatpush1.msra.mxu0 0.0
    %918 = vmatprep.subr.mxu0 0.0
    %919 = vmatpush1.msra.mxu0 0.0
    %920 = vmatprep.subr.mxu0 0.0
    %921 = vmatpush1.msra.mxu0 0.0
    %922 = vmatprep.subr.mxu0 0.0
    %923 = vmatpush1.msra.mxu0 0.0
    %924 = vmatprep.subr.mxu0 0.0
    %925 = vmatpush1.msra.mxu0 0.0
    %926 = vmatprep.subr.mxu0 0.0
    %927 = vmatpush1.msra.mxu0 0.0
    %928 = vmatprep.subr.mxu0 0.0
    %929 = vmatpush1.msra.mxu0 0.0
    %930 = vmatprep.subr.mxu0 0.0
    %931 = vmatpush1.msra.mxu0 0.0
    %932 = vmatprep.subr.mxu0 0.0
    %933 = vmatpush1.msra.mxu0 0.0
    %934 = vmatprep.subr.mxu0 0.0
    %935 = vmatpush1.msra.mxu0 %v52
    %936 = vmatprep.subr.mxu0 0.0
    %937 = vmatpush1.msra.mxu0 %v51
    %938 = vmatprep.subr.mxu0 0.0
    %939 = vmatpush1.msra.mxu0 %v50
    %940 = vmatprep.subr.mxu0 0.0
    %941 = vmatpush1.msra.mxu0 %v49
    %942 = vmatprep.subr.mxu0 0.0
    %943 = vmatpush2.msra.mxu0 0.0
    %944 = vmatprep.subr.mxu0 0.0
    %945 = vmatpush2.msra.mxu0 0.0
    %946 = vmatprep.subr.mxu0 0.0
    %947 = vmatpush2.msra.mxu0 0.0
    %948 = vmatprep.subr.mxu0 0.0
    %949 = vmatpush2.msra.mxu0 0.0
    %950 = vmatprep.subr.mxu0 0.0
    %951 = vmatpush2.msra.mxu0 0.0
    %952 = vmatprep.subr.mxu0 0.0
    %953 = vmatpush2.msra.mxu0 0.0
    %954 = vmatprep.subr.mxu0 0.0
    %955 = vmatpush2.msra.mxu0 0.0
    %956 = vmatprep.subr.mxu0 0.0
    %957 = vmatpush2.msra.mxu0 0.0
    %958 = vmatprep.subr.mxu0 0.0
    %959 = vmatpush2.msra.mxu0 0.0
    %960 = vmatprep.subr.mxu0 0.0
    %961 = vmatpush2.msra.mxu0 0.0
    %962 = vmatprep.subr.mxu0 0.0
    %963 = vmatpush2.msra.mxu0 0.0
    %964 = vmatprep.subr.mxu0 0.0
    %965 = vmatpush2.msra.mxu0 0.0
    %966 = vmatprep.subr.mxu0 0.0
    %967 = vmatpush2.msra.mxu0 0.0
    %968 = vmatprep.subr.mxu0 0.0
    %969 = vmatpush2.msra.mxu0 0.0
    %970 = vmatprep.subr.mxu0 0.0
    %971 = vmatpush2.msra.mxu0 0.0
    %972 = vmatprep.subr.mxu0 0.0
    %973 = vmatpush2.msra.mxu0 0.0
    %974 = vmatprep.mubr.f32.mxu0 0.0
    %975 = vmatmul.mubr.f32.gmra.mxu0 %v835
    %v976 = vpop.f32.mrf.mxu0
    %v977 = vadd.f32 0.0, %v976
    %v978 = vpop.f32.mrf.mxu0
    %979 = vdwg.mxu0
    %v980 = vadd.f32 %v152, %v977
    %v981 = vxor.u32 %v980, 2147483648
    %v982 = vmul.f32 %v981, 1.442695
    %v983 = vpow.pop %v982
    %v984 = vadd.f32 %v983, 1.0
    %v985 = vrcp.pop %v984
    %v986 = vmul.f32 1.0, %v985
    %v987 = vtanh.pop %v980
    %v989 = vrot.slane %v815, 4
    %v991 = vmul.f32 %v986, %v989
    %993 = vrot.lane.b32.xlu0 %v987, 64
    %v994 = vpop.permute.xlu0 %993
    %v996 = vmul.f32 %v986, %v994
    %998 = vrot.lane.b32.xlu0 %v996, 32
    %v999 = vpop.permute.xlu0 %998
    %v1001 = vadd.f32 %v991, %v999
    %v1002 = vtanh.pop %v1001
    %1004 = vrot.lane.b32.xlu0 %v1002, 64
    %v1005 = vpop.permute.xlu0 %1004
    %v1007 = vmul.f32 %v986, %v1005
    %s1008 = scalar_lea.vmem [#allocation2], 256
    %v1009 = vld [vmem:[%s1008] sm:$0xff]
    %v1010 = vld [vmem:[%s1008 + $0x8] sm:$0xff]
    %v1011 = vld [vmem:[%s1008 + $0x10] sm:$0xff]
    %v1012 = vld [vmem:[%s1008 + $0x18] sm:$0xff]
    %v1013 = vld [vmem:[%s1008 + $0x20] sm:$0xff]
    %v1014 = vld [vmem:[%s1008 + $0x28] sm:$0xff]
    %v1015 = vld [vmem:[%s1008 + $0x30] sm:$0xff]
    %v1016 = vld [vmem:[%s1008 + $0x38] sm:$0xff]
    %1018 = vrot.lane.b32.xlu0 %v1007, 32
    %v1019 = vpop.permute.xlu0 %1018
    %v1020 = vsel %vm162, %v1019, 0
    %1022 = vmatprep.subr.mxu0 0.0
    %1023 = vmatpush1.msra.mxu0 0.0
    %1024 = vmatprep.subr.mxu0 0.0
    %1025 = vmatpush1.msra.mxu0 0.0
    %1026 = vmatprep.subr.mxu0 0.0
    %1027 = vmatpush1.msra.mxu0 0.0
    %1028 = vmatprep.subr.mxu0 0.0
    %1029 = vmatpush1.msra.mxu0 0.0
    %1030 = vmatprep.subr.mxu0 0.0
    %1031 = vmatpush1.msra.mxu0 0.0
    %1032 = vmatprep.subr.mxu0 0.0
    %1033 = vmatpush1.msra.mxu0 0.0
    %1034 = vmatprep.subr.mxu0 0.0
    %1035 = vmatpush1.msra.mxu0 0.0
    %1036 = vmatprep.subr.mxu0 0.0
    %1037 = vmatpush1.msra.mxu0 0.0
    %1038 = vmatprep.subr.mxu0 0.0
    %1039 = vmatpush1.msra.mxu0 0.0
    %1040 = vmatprep.subr.mxu0 0.0
    %1041 = vmatpush1.msra.mxu0 0.0
    %1042 = vmatprep.subr.mxu0 0.0
    %1043 = vmatpush1.msra.mxu0 0.0
    %1044 = vmatprep.subr.mxu0 0.0
    %1045 = vmatpush1.msra.mxu0 0.0
    %1046 = vmatprep.subr.mxu0 %v1016
    %1047 = vmatpush1.msra.mxu0 %v1015
    %1048 = vmatprep.subr.mxu0 %v1014
    %1049 = vmatpush1.msra.mxu0 %v1013
    %1050 = vmatprep.subr.mxu0 %v1012
    %1051 = vmatpush1.msra.mxu0 %v1011
    %1052 = vmatprep.subr.mxu0 %v1010
    %1053 = vmatpush1.msra.mxu0 %v1009
    %1054 = vmatprep.subr.mxu0 0.0
    %1055 = vmatpush2.msra.mxu0 0.0
    %1056 = vmatprep.subr.mxu0 0.0
    %1057 = vmatpush2.msra.mxu0 0.0
    %1058 = vmatprep.subr.mxu0 0.0
    %1059 = vmatpush2.msra.mxu0 0.0
    %1060 = vmatprep.subr.mxu0 0.0
    %1061 = vmatpush2.msra.mxu0 0.0
    %1062 = vmatprep.subr.mxu0 0.0
    %1063 = vmatpush2.msra.mxu0 0.0
    %1064 = vmatprep.subr.mxu0 0.0
    %1065 = vmatpush2.msra.mxu0 0.0
    %1066 = vmatprep.subr.mxu0 0.0
    %1067 = vmatpush2.msra.mxu0 0.0
    %1068 = vmatprep.subr.mxu0 0.0
    %1069 = vmatpush2.msra.mxu0 0.0
    %1070 = vmatprep.subr.mxu0 0.0
    %1071 = vmatpush2.msra.mxu0 0.0
    %1072 = vmatprep.subr.mxu0 0.0
    %1073 = vmatpush2.msra.mxu0 0.0
    %1074 = vmatprep.subr.mxu0 0.0
    %1075 = vmatpush2.msra.mxu0 0.0
    %1076 = vmatprep.subr.mxu0 0.0
    %1077 = vmatpush2.msra.mxu0 0.0
    %1078 = vmatprep.subr.mxu0 0.0
    %1079 = vmatpush2.msra.mxu0 0.0
    %1080 = vmatprep.subr.mxu0 0.0
    %1081 = vmatpush2.msra.mxu0 0.0
    %1082 = vmatprep.subr.mxu0 0.0
    %1083 = vmatpush2.msra.mxu0 0.0
    %1084 = vmatprep.subr.mxu0 0.0
    %1085 = vmatpush2.msra.mxu0 0.0
    %1086 = vmatprep.mubr.f32.mxu0 0.0
    %1087 = vmatmul.mubr.f32.gmra.mxu0 %v1020
    %v1088 = vpop.f32.mrf.mxu0
    %v1089 = vadd.f32 0.0, %v1088
    %v1090 = vpop.f32.mrf.mxu0
    %v1091 = vadd.f32 0.0, %v1090
    %1092 = vdwg.mxu0
    %v1093 = vadd.f32 %v908, %v1089
    %v1094 = vadd.f32 %v909, %v1091
    %1095 = vmatprep.subr.mxu0 0.0
    %1096 = vmatpush1.msra.mxu0 0.0
    %1097 = vmatprep.subr.mxu0 0.0
    %1098 = vmatpush1.msra.mxu0 0.0
    %1099 = vmatprep.subr.mxu0 0.0
    %1100 = vmatpush1.msra.mxu0 0.0
    %1101 = vmatprep.subr.mxu0 0.0
    %1102 = vmatpush1.msra.mxu0 0.0
    %1103 = vmatprep.subr.mxu0 0.0
    %1104 = vmatpush1.msra.mxu0 0.0
    %1105 = vmatprep.subr.mxu0 0.0
    %1106 = vmatpush1.msra.mxu0 0.0
    %1107 = vmatprep.subr.mxu0 0.0
    %1108 = vmatpush1.msra.mxu0 0.0
    %1109 = vmatprep.subr.mxu0 0.0
    %1110 = vmatpush1.msra.mxu0 0.0
    %1111 = vmatprep.subr.mxu0 0.0
    %1112 = vmatpush1.msra.mxu0 0.0
    %1113 = vmatprep.subr.mxu0 0.0
    %1114 = vmatpush1.msra.mxu0 0.0
    %1115 = vmatprep.subr.mxu0 0.0
    %1116 = vmatpush1.msra.mxu0 0.0
    %1117 = vmatprep.subr.mxu0 0.0
    %1118 = vmatpush1.msra.mxu0 0.0
    %1119 = vmatprep.subr.mxu0 0.0
    %1120 = vmatpush1.msra.mxu0 %v52
    %1121 = vmatprep.subr.mxu0 0.0
    %1122 = vmatpush1.msra.mxu0 %v51
    %1123 = vmatprep.subr.mxu0 0.0
    %1124 = vmatpush1.msra.mxu0 %v50
    %1125 = vmatprep.subr.mxu0 0.0
    %1126 = vmatpush1.msra.mxu0 %v49
    %1127 = vmatprep.subr.mxu0 0.0
    %1128 = vmatpush2.msra.mxu0 0.0
    %1129 = vmatprep.subr.mxu0 0.0
    %1130 = vmatpush2.msra.mxu0 0.0
    %1131 = vmatprep.subr.mxu0 0.0
    %1132 = vmatpush2.msra.mxu0 0.0
    %1133 = vmatprep.subr.mxu0 0.0
    %1134 = vmatpush2.msra.mxu0 0.0
    %1135 = vmatprep.subr.mxu0 0.0
    %1136 = vmatpush2.msra.mxu0 0.0
    %1137 = vmatprep.subr.mxu0 0.0
    %1138 = vmatpush2.msra.mxu0 0.0
    %1139 = vmatprep.subr.mxu0 0.0
    %1140 = vmatpush2.msra.mxu0 0.0
    %1141 = vmatprep.subr.mxu0 0.0
    %1142 = vmatpush2.msra.mxu0 0.0
    %1143 = vmatprep.subr.mxu0 0.0
    %1144 = vmatpush2.msra.mxu0 0.0
    %1145 = vmatprep.subr.mxu0 0.0
    %1146 = vmatpush2.msra.mxu0 0.0
    %1147 = vmatprep.subr.mxu0 0.0
    %1148 = vmatpush2.msra.mxu0 0.0
    %1149 = vmatprep.subr.mxu0 0.0
    %1150 = vmatpush2.msra.mxu0 0.0
    %1151 = vmatprep.subr.mxu0 0.0
    %1152 = vmatpush2.msra.mxu0 0.0
    %1153 = vmatprep.subr.mxu0 0.0
    %1154 = vmatpush2.msra.mxu0 0.0
    %1155 = vmatprep.subr.mxu0 0.0
    %1156 = vmatpush2.msra.mxu0 0.0
    %1157 = vmatprep.subr.mxu0 0.0
    %1158 = vmatpush2.msra.mxu0 0.0
    %1159 = vmatprep.mubr.f32.mxu0 0.0
    %1160 = vmatmul.mubr.f32.gmra.mxu0 %v1020
    %v1161 = vpop.f32.mrf.mxu0
    %v1162 = vadd.f32 0.0, %v1161
    %v1163 = vpop.f32.mrf.mxu0
    %1164 = vdwg.mxu0
    %v1166 = vrot.slane %v1162, 4
    %v1168 = vadd.f32 %v152, %v1166
    %v1169 = vxor.u32 %v1168, 2147483648
    %v1170 = vmul.f32 %v1169, 1.442695
    %v1171 = vpow.pop %v1170
    %v1172 = vadd.f32 %v1171, 1.0
    %v1173 = vrcp.pop %v1172
    %v1174 = vmul.f32 1.0, %v1173
    %v1175 = vtanh.pop %v1168
    %v1177 = vrot.slane %v1001, 4
    %v1179 = vmul.f32 %v1174, %v1177
    %1181 = vrot.lane.b32.xlu0 %v1175, 64
    %v1182 = vpop.permute.xlu0 %1181
    %v1184 = vmul.f32 %v1174, %v1182
    %1186 = vrot.lane.b32.xlu0 %v1184, 32
    %v1187 = vpop.permute.xlu0 %1186
    %v1189 = vadd.f32 %v1179, %v1187
    %v1190 = vtanh.pop %v1189
    %1192 = vrot.lane.b32.xlu0 %v1190, 64
    %v1193 = vpop.permute.xlu0 %1192
    %v1195 = vmul.f32 %v1174, %v1193
    %s1196 = scalar_lea.vmem [#allocation2], 320
    %v1197 = vld [vmem:[%s1196] sm:$0xff]
    %v1198 = vld [vmem:[%s1196 + $0x8] sm:$0xff]
    %v1199 = vld [vmem:[%s1196 + $0x10] sm:$0xff]
    %v1200 = vld [vmem:[%s1196 + $0x18] sm:$0xff]
    %v1201 = vld [vmem:[%s1196 + $0x20] sm:$0xff]
    %v1202 = vld [vmem:[%s1196 + $0x28] sm:$0xff]
    %v1203 = vld [vmem:[%s1196 + $0x30] sm:$0xff]
    %v1204 = vld [vmem:[%s1196 + $0x38] sm:$0xff]
    %v1206 = vrot.slane %v1195, 4
    %1207 = vrot.lane.b32.xlu0 %v1206, 32
    %v1208 = vpop.permute.xlu0 %1207
    %v1209 = vsel %vm162, %v1208, 0
    %1211 = vmatprep.subr.mxu0 0.0
    %1212 = vmatpush1.msra.mxu0 0.0
    %1213 = vmatprep.subr.mxu0 0.0
    %1214 = vmatpush1.msra.mxu0 0.0
    %1215 = vmatprep.subr.mxu0 0.0
    %1216 = vmatpush1.msra.mxu0 0.0
    %1217 = vmatprep.subr.mxu0 0.0
    %1218 = vmatpush1.msra.mxu0 0.0
    %1219 = vmatprep.subr.mxu0 0.0
    %1220 = vmatpush1.msra.mxu0 0.0
    %1221 = vmatprep.subr.mxu0 0.0
    %1222 = vmatpush1.msra.mxu0 0.0
    %1223 = vmatprep.subr.mxu0 0.0
    %1224 = vmatpush1.msra.mxu0 0.0
    %1225 = vmatprep.subr.mxu0 0.0
    %1226 = vmatpush1.msra.mxu0 0.0
    %1227 = vmatprep.subr.mxu0 0.0
    %1228 = vmatpush1.msra.mxu0 0.0
    %1229 = vmatprep.subr.mxu0 0.0
    %1230 = vmatpush1.msra.mxu0 0.0
    %1231 = vmatprep.subr.mxu0 0.0
    %1232 = vmatpush1.msra.mxu0 0.0
    %1233 = vmatprep.subr.mxu0 0.0
    %1234 = vmatpush1.msra.mxu0 0.0
    %1235 = vmatprep.subr.mxu0 %v1204
    %1236 = vmatpush1.msra.mxu0 %v1203
    %1237 = vmatprep.subr.mxu0 %v1202
    %1238 = vmatpush1.msra.mxu0 %v1201
    %1239 = vmatprep.subr.mxu0 %v1200
    %1240 = vmatpush1.msra.mxu0 %v1199
    %1241 = vmatprep.subr.mxu0 %v1198
    %1242 = vmatpush1.msra.mxu0 %v1197
    %1243 = vmatprep.subr.mxu0 0.0
    %1244 = vmatpush2.msra.mxu0 0.0
    %1245 = vmatprep.subr.mxu0 0.0
    %1246 = vmatpush2.msra.mxu0 0.0
    %1247 = vmatprep.subr.mxu0 0.0
    %1248 = vmatpush2.msra.mxu0 0.0
    %1249 = vmatprep.subr.mxu0 0.0
    %1250 = vmatpush2.msra.mxu0 0.0
    %1251 = vmatprep.subr.mxu0 0.0
    %1252 = vmatpush2.msra.mxu0 0.0
    %1253 = vmatprep.subr.mxu0 0.0
    %1254 = vmatpush2.msra.mxu0 0.0
    %1255 = vmatprep.subr.mxu0 0.0
    %1256 = vmatpush2.msra.mxu0 0.0
    %1257 = vmatprep.subr.mxu0 0.0
    %1258 = vmatpush2.msra.mxu0 0.0
    %1259 = vmatprep.subr.mxu0 0.0
    %1260 = vmatpush2.msra.mxu0 0.0
    %1261 = vmatprep.subr.mxu0 0.0
    %1262 = vmatpush2.msra.mxu0 0.0
    %1263 = vmatprep.subr.mxu0 0.0
    %1264 = vmatpush2.msra.mxu0 0.0
    %1265 = vmatprep.subr.mxu0 0.0
    %1266 = vmatpush2.msra.mxu0 0.0
    %1267 = vmatprep.subr.mxu0 0.0
    %1268 = vmatpush2.msra.mxu0 0.0
    %1269 = vmatprep.subr.mxu0 0.0
    %1270 = vmatpush2.msra.mxu0 0.0
    %1271 = vmatprep.subr.mxu0 0.0
    %1272 = vmatpush2.msra.mxu0 0.0
    %1273 = vmatprep.subr.mxu0 0.0
    %1274 = vmatpush2.msra.mxu0 0.0
    %1275 = vmatprep.mubr.f32.mxu0 0.0
    %1276 = vmatmul.mubr.f32.gmra.mxu0 %v1209
    %v1277 = vpop.f32.mrf.mxu0
    %v1278 = vadd.f32 0.0, %v1277
    %v1279 = vpop.f32.mrf.mxu0
    %v1280 = vadd.f32 0.0, %v1279
    %1281 = vdwg.mxu0
    %v1282 = vadd.f32 %v1093, %v1278
    %v1283 = vadd.f32 %v1094, %v1280
    %1284 = vmatprep.subr.mxu0 0.0
    %1285 = vmatpush1.msra.mxu0 0.0
    %1286 = vmatprep.subr.mxu0 0.0
    %1287 = vmatpush1.msra.mxu0 0.0
    %1288 = vmatprep.subr.mxu0 0.0
    %1289 = vmatpush1.msra.mxu0 0.0
    %1290 = vmatprep.subr.mxu0 0.0
    %1291 = vmatpush1.msra.mxu0 0.0
    %1292 = vmatprep.subr.mxu0 0.0
    %1293 = vmatpush1.msra.mxu0 0.0
    %1294 = vmatprep.subr.mxu0 0.0
    %1295 = vmatpush1.msra.mxu0 0.0
    %1296 = vmatprep.subr.mxu0 0.0
    %1297 = vmatpush1.msra.mxu0 0.0
    %1298 = vmatprep.subr.mxu0 0.0
    %1299 = vmatpush1.msra.mxu0 0.0
    %1300 = vmatprep.subr.mxu0 0.0
    %1301 = vmatpush1.msra.mxu0 0.0
    %1302 = vmatprep.subr.mxu0 0.0
    %1303 = vmatpush1.msra.mxu0 0.0
    %1304 = vmatprep.subr.mxu0 0.0
    %1305 = vmatpush1.msra.mxu0 0.0
    %1306 = vmatprep.subr.mxu0 0.0
    %1307 = vmatpush1.msra.mxu0 0.0
    %1308 = vmatprep.subr.mxu0 0.0
    %1309 = vmatpush1.msra.mxu0 %v52
    %1310 = vmatprep.subr.mxu0 0.0
    %1311 = vmatpush1.msra.mxu0 %v51
    %1312 = vmatprep.subr.mxu0 0.0
    %1313 = vmatpush1.msra.mxu0 %v50
    %1314 = vmatprep.subr.mxu0 0.0
    %1315 = vmatpush1.msra.mxu0 %v49
    %1316 = vmatprep.subr.mxu0 0.0
    %1317 = vmatpush2.msra.mxu0 0.0
    %1318 = vmatprep.subr.mxu0 0.0
    %1319 = vmatpush2.msra.mxu0 0.0
    %1320 = vmatprep.subr.mxu0 0.0
    %1321 = vmatpush2.msra.mxu0 0.0
    %1322 = vmatprep.subr.mxu0 0.0
    %1323 = vmatpush2.msra.mxu0 0.0
    %1324 = vmatprep.subr.mxu0 0.0
    %1325 = vmatpush2.msra.mxu0 0.0
    %1326 = vmatprep.subr.mxu0 0.0
    %1327 = vmatpush2.msra.mxu0 0.0
    %1328 = vmatprep.subr.mxu0 0.0
    %1329 = vmatpush2.msra.mxu0 0.0
    %1330 = vmatprep.subr.mxu0 0.0
    %1331 = vmatpush2.msra.mxu0 0.0
    %1332 = vmatprep.subr.mxu0 0.0
    %1333 = vmatpush2.msra.mxu0 0.0
    %1334 = vmatprep.subr.mxu0 0.0
    %1335 = vmatpush2.msra.mxu0 0.0
    %1336 = vmatprep.subr.mxu0 0.0
    %1337 = vmatpush2.msra.mxu0 0.0
    %1338 = vmatprep.subr.mxu0 0.0
    %1339 = vmatpush2.msra.mxu0 0.0
    %1340 = vmatprep.subr.mxu0 0.0
    %1341 = vmatpush2.msra.mxu0 0.0
    %1342 = vmatprep.subr.mxu0 0.0
    %1343 = vmatpush2.msra.mxu0 0.0
    %1344 = vmatprep.subr.mxu0 0.0
    %1345 = vmatpush2.msra.mxu0 0.0
    %1346 = vmatprep.subr.mxu0 0.0
    %1347 = vmatpush2.msra.mxu0 0.0
    %1348 = vmatprep.mubr.f32.mxu0 0.0
    %1349 = vmatmul.mubr.f32.gmra.mxu0 %v1209
    %v1350 = vpop.f32.mrf.mxu0
    %v1351 = vadd.f32 0.0, %v1350
    %v1352 = vpop.f32.mrf.mxu0
    %1353 = vdwg.mxu0
    %v1354 = vadd.f32 %v157, %v1351
    %v1355 = vxor.u32 %v1354, 2147483648
    %v1356 = vmul.f32 %v1355, 1.442695
    %v1357 = vpow.pop %v1356
    %v1358 = vadd.f32 %v1357, 1.0
    %v1359 = vrcp.pop %v1358
    %v1360 = vmul.f32 1.0, %v1359
    %v1361 = vtanh.pop %v1354
    %v1363 = vrot.slane %v1189, 4
    %v1365 = vmul.f32 %v1360, %v1363
    %1367 = vrot.lane.b32.xlu0 %v1361, 64
    %v1368 = vpop.permute.xlu0 %1367
    %v1370 = vmul.f32 %v1360, %v1368
    %1372 = vrot.lane.b32.xlu0 %v1370, 32
    %v1373 = vpop.permute.xlu0 %1372
    %v1375 = vadd.f32 %v1365, %v1373
    %v1376 = vtanh.pop %v1375
    %1378 = vrot.lane.b32.xlu0 %v1376, 64
    %v1379 = vpop.permute.xlu0 %1378
    %v1381 = vmul.f32 %v1360, %v1379
    %s1382 = scalar_lea.vmem [#allocation2], 384
    %v1383 = vld [vmem:[%s1382] sm:$0xff]
    %v1384 = vld [vmem:[%s1382 + $0x8] sm:$0xff]
    %v1385 = vld [vmem:[%s1382 + $0x10] sm:$0xff]
    %v1386 = vld [vmem:[%s1382 + $0x18] sm:$0xff]
    %v1387 = vld [vmem:[%s1382 + $0x20] sm:$0xff]
    %v1388 = vld [vmem:[%s1382 + $0x28] sm:$0xff]
    %v1389 = vld [vmem:[%s1382 + $0x30] sm:$0xff]
    %v1390 = vld [vmem:[%s1382 + $0x38] sm:$0xff]
    %1392 = vrot.lane.b32.xlu0 %v1381, 32
    %v1393 = vpop.permute.xlu0 %1392
    %v1394 = vsel %vm162, %v1393, 0
    %1396 = vmatprep.subr.mxu0 0.0
    %1397 = vmatpush1.msra.mxu0 0.0
    %1398 = vmatprep.subr.mxu0 0.0
    %1399 = vmatpush1.msra.mxu0 0.0
    %1400 = vmatprep.subr.mxu0 0.0
    %1401 = vmatpush1.msra.mxu0 0.0
    %1402 = vmatprep.subr.mxu0 0.0
    %1403 = vmatpush1.msra.mxu0 0.0
    %1404 = vmatprep.subr.mxu0 0.0
    %1405 = vmatpush1.msra.mxu0 0.0
    %1406 = vmatprep.subr.mxu0 0.0
    %1407 = vmatpush1.msra.mxu0 0.0
    %1408 = vmatprep.subr.mxu0 0.0
    %1409 = vmatpush1.msra.mxu0 0.0
    %1410 = vmatprep.subr.mxu0 0.0
    %1411 = vmatpush1.msra.mxu0 0.0
    %1412 = vmatprep.subr.mxu0 0.0
    %1413 = vmatpush1.msra.mxu0 0.0
    %1414 = vmatprep.subr.mxu0 0.0
    %1415 = vmatpush1.msra.mxu0 0.0
    %1416 = vmatprep.subr.mxu0 0.0
    %1417 = vmatpush1.msra.mxu0 0.0
    %1418 = vmatprep.subr.mxu0 0.0
    %1419 = vmatpush1.msra.mxu0 0.0
    %1420 = vmatprep.subr.mxu0 %v1390
    %1421 = vmatpush1.msra.mxu0 %v1389
    %1422 = vmatprep.subr.mxu0 %v1388
    %1423 = vmatpush1.msra.mxu0 %v1387
    %1424 = vmatprep.subr.mxu0 %v1386
    %1425 = vmatpush1.msra.mxu0 %v1385
    %1426 = vmatprep.subr.mxu0 %v1384
    %1427 = vmatpush1.msra.mxu0 %v1383
    %1428 = vmatprep.subr.mxu0 0.0
    %1429 = vmatpush2.msra.mxu0 0.0
    %1430 = vmatprep.subr.mxu0 0.0
    %1431 = vmatpush2.msra.mxu0 0.0
    %1432 = vmatprep.subr.mxu0 0.0
    %1433 = vmatpush2.msra.mxu0 0.0
    %1434 = vmatprep.subr.mxu0 0.0
    %1435 = vmatpush2.msra.mxu0 0.0
    %1436 = vmatprep.subr.mxu0 0.0
    %1437 = vmatpush2.msra.mxu0 0.0
    %1438 = vmatprep.subr.mxu0 0.0
    %1439 = vmatpush2.msra.mxu0 0.0
    %1440 = vmatprep.subr.mxu0 0.0
    %1441 = vmatpush2.msra.mxu0 0.0
    %1442 = vmatprep.subr.mxu0 0.0
    %1443 = vmatpush2.msra.mxu0 0.0
    %1444 = vmatprep.subr.mxu0 0.0
    %1445 = vmatpush2.msra.mxu0 0.0
    %1446 = vmatprep.subr.mxu0 0.0
    %1447 = vmatpush2.msra.mxu0 0.0
    %1448 = vmatprep.subr.mxu0 0.0
    %1449 = vmatpush2.msra.mxu0 0.0
    %1450 = vmatprep.subr.mxu0 0.0
    %1451 = vmatpush2.msra.mxu0 0.0
    %1452 = vmatprep.subr.mxu0 0.0
    %1453 = vmatpush2.msra.mxu0 0.0
    %1454 = vmatprep.subr.mxu0 0.0
    %1455 = vmatpush2.msra.mxu0 0.0
    %1456 = vmatprep.subr.mxu0 0.0
    %1457 = vmatpush2.msra.mxu0 0.0
    %1458 = vmatprep.subr.mxu0 0.0
    %1459 = vmatpush2.msra.mxu0 0.0
    %1460 = vmatprep.mubr.f32.mxu0 0.0
    %1461 = vmatmul.mubr.f32.gmra.mxu0 %v1394
    %v1462 = vpop.f32.mrf.mxu0
    %v1463 = vadd.f32 0.0, %v1462
    %v1464 = vpop.f32.mrf.mxu0
    %v1465 = vadd.f32 0.0, %v1464
    %1466 = vdwg.mxu0
    %v1467 = vadd.f32 %v1282, %v1463
    %v1468 = vadd.f32 %v1283, %v1465
    %1469 = vmatprep.subr.mxu0 0.0
    %1470 = vmatpush1.msra.mxu0 0.0
    %1471 = vmatprep.subr.mxu0 0.0
    %1472 = vmatpush1.msra.mxu0 0.0
    %1473 = vmatprep.subr.mxu0 0.0
    %1474 = vmatpush1.msra.mxu0 0.0
    %1475 = vmatprep.subr.mxu0 0.0
    %1476 = vmatpush1.msra.mxu0 0.0
    %1477 = vmatprep.subr.mxu0 0.0
    %1478 = vmatpush1.msra.mxu0 0.0
    %1479 = vmatprep.subr.mxu0 0.0
    %1480 = vmatpush1.msra.mxu0 0.0
    %1481 = vmatprep.subr.mxu0 0.0
    %1482 = vmatpush1.msra.mxu0 0.0
    %1483 = vmatprep.subr.mxu0 0.0
    %1484 = vmatpush1.msra.mxu0 0.0
    %1485 = vmatprep.subr.mxu0 0.0
    %1486 = vmatpush1.msra.mxu0 0.0
    %1487 = vmatprep.subr.mxu0 0.0
    %1488 = vmatpush1.msra.mxu0 0.0
    %1489 = vmatprep.subr.mxu0 0.0
    %1490 = vmatpush1.msra.mxu0 0.0
    %1491 = vmatprep.subr.mxu0 0.0
    %1492 = vmatpush1.msra.mxu0 0.0
    %1493 = vmatprep.subr.mxu0 0.0
    %1494 = vmatpush1.msra.mxu0 %v52
    %1495 = vmatprep.subr.mxu0 0.0
    %1496 = vmatpush1.msra.mxu0 %v51
    %1497 = vmatprep.subr.mxu0 0.0
    %1498 = vmatpush1.msra.mxu0 %v50
    %1499 = vmatprep.subr.mxu0 0.0
    %1500 = vmatpush1.msra.mxu0 %v49
    %1501 = vmatprep.subr.mxu0 0.0
    %1502 = vmatpush2.msra.mxu0 0.0
    %1503 = vmatprep.subr.mxu0 0.0
    %1504 = vmatpush2.msra.mxu0 0.0
    %1505 = vmatprep.subr.mxu0 0.0
    %1506 = vmatpush2.msra.mxu0 0.0
    %1507 = vmatprep.subr.mxu0 0.0
    %1508 = vmatpush2.msra.mxu0 0.0
    %1509 = vmatprep.subr.mxu0 0.0
    %1510 = vmatpush2.msra.mxu0 0.0
    %1511 = vmatprep.subr.mxu0 0.0
    %1512 = vmatpush2.msra.mxu0 0.0
    %1513 = vmatprep.subr.mxu0 0.0
    %1514 = vmatpush2.msra.mxu0 0.0
    %1515 = vmatprep.subr.mxu0 0.0
    %1516 = vmatpush2.msra.mxu0 0.0
    %1517 = vmatprep.subr.mxu0 0.0
    %1518 = vmatpush2.msra.mxu0 0.0
    %1519 = vmatprep.subr.mxu0 0.0
    %1520 = vmatpush2.msra.mxu0 0.0
    %1521 = vmatprep.subr.mxu0 0.0
    %1522 = vmatpush2.msra.mxu0 0.0
    %1523 = vmatprep.subr.mxu0 0.0
    %1524 = vmatpush2.msra.mxu0 0.0
    %1525 = vmatprep.subr.mxu0 0.0
    %1526 = vmatpush2.msra.mxu0 0.0
    %1527 = vmatprep.subr.mxu0 0.0
    %1528 = vmatpush2.msra.mxu0 0.0
    %1529 = vmatprep.subr.mxu0 0.0
    %1530 = vmatpush2.msra.mxu0 0.0
    %1531 = vmatprep.subr.mxu0 0.0
    %1532 = vmatpush2.msra.mxu0 0.0
    %1533 = vmatprep.mubr.f32.mxu0 0.0
    %1534 = vmatmul.mubr.f32.gmra.mxu0 %v1394
    %v1535 = vpop.f32.mrf.mxu0
    %v1536 = vadd.f32 0.0, %v1535
    %v1537 = vpop.f32.mrf.mxu0
    %1538 = vdwg.mxu0
    %v1540 = vrot.slane %v1536, 4
    %v1542 = vadd.f32 %v157, %v1540
    %v1543 = vxor.u32 %v1542, 2147483648
    %v1544 = vmul.f32 %v1543, 1.442695
    %v1545 = vpow.pop %v1544
    %v1546 = vadd.f32 %v1545, 1.0
    %v1547 = vrcp.pop %v1546
    %v1548 = vmul.f32 1.0, %v1547
    %v1549 = vtanh.pop %v1542
    %v1551 = vrot.slane %v1375, 4
    %v1553 = vmul.f32 %v1548, %v1551
    %1555 = vrot.lane.b32.xlu0 %v1549, 64
    %v1556 = vpop.permute.xlu0 %1555
    %v1558 = vmul.f32 %v1548, %v1556
    %1560 = vrot.lane.b32.xlu0 %v1558, 32
    %v1561 = vpop.permute.xlu0 %1560
    %v1563 = vadd.f32 %v1553, %v1561
    %v1564 = vtanh.pop %v1563
    %1566 = vrot.lane.b32.xlu0 %v1564, 64
    %v1567 = vpop.permute.xlu0 %1566
    %v1569 = vmul.f32 %v1548, %v1567
    %s1570 = scalar_lea.vmem [#allocation2], 448
    %v1571 = vld [vmem:[%s1570] sm:$0xff]
    %v1572 = vld [vmem:[%s1570 + $0x8] sm:$0xff]
    %v1573 = vld [vmem:[%s1570 + $0x10] sm:$0xff]
    %v1574 = vld [vmem:[%s1570 + $0x18] sm:$0xff]
    %v1575 = vld [vmem:[%s1570 + $0x20] sm:$0xff]
    %v1576 = vld [vmem:[%s1570 + $0x28] sm:$0xff]
    %v1577 = vld [vmem:[%s1570 + $0x30] sm:$0xff]
    %v1578 = vld [vmem:[%s1570 + $0x38] sm:$0xff]
    %v1580 = vrot.slane %v1569, 4
    %1581 = vrot.lane.b32.xlu0 %v1580, 32
    %v1582 = vpop.permute.xlu0 %1581
    %v1583 = vsel %vm162, %v1582, 0
    %1585 = vmatprep.subr.mxu0 0.0
    %1586 = vmatpush1.msra.mxu0 0.0
    %1587 = vmatprep.subr.mxu0 0.0
    %1588 = vmatpush1.msra.mxu0 0.0
    %1589 = vmatprep.subr.mxu0 0.0
    %1590 = vmatpush1.msra.mxu0 0.0
    %1591 = vmatprep.subr.mxu0 0.0
    %1592 = vmatpush1.msra.mxu0 0.0
    %1593 = vmatprep.subr.mxu0 0.0
    %1594 = vmatpush1.msra.mxu0 0.0
    %1595 = vmatprep.subr.mxu0 0.0
    %1596 = vmatpush1.msra.mxu0 0.0
    %1597 = vmatprep.subr.mxu0 0.0
    %1598 = vmatpush1.msra.mxu0 0.0
    %1599 = vmatprep.subr.mxu0 0.0
    %1600 = vmatpush1.msra.mxu0 0.0
    %1601 = vmatprep.subr.mxu0 0.0
    %1602 = vmatpush1.msra.mxu0 0.0
    %1603 = vmatprep.subr.mxu0 0.0
    %1604 = vmatpush1.msra.mxu0 0.0
    %1605 = vmatprep.subr.mxu0 0.0
    %1606 = vmatpush1.msra.mxu0 0.0
    %1607 = vmatprep.subr.mxu0 0.0
    %1608 = vmatpush1.msra.mxu0 0.0
    %1609 = vmatprep.subr.mxu0 %v1578
    %1610 = vmatpush1.msra.mxu0 %v1577
    %1611 = vmatprep.subr.mxu0 %v1576
    %1612 = vmatpush1.msra.mxu0 %v1575
    %1613 = vmatprep.subr.mxu0 %v1574
    %1614 = vmatpush1.msra.mxu0 %v1573
    %1615 = vmatprep.subr.mxu0 %v1572
    %1616 = vmatpush1.msra.mxu0 %v1571
    %1617 = vmatprep.subr.mxu0 0.0
    %1618 = vmatpush2.msra.mxu0 0.0
    %1619 = vmatprep.subr.mxu0 0.0
    %1620 = vmatpush2.msra.mxu0 0.0
    %1621 = vmatprep.subr.mxu0 0.0
    %1622 = vmatpush2.msra.mxu0 0.0
    %1623 = vmatprep.subr.mxu0 0.0
    %1624 = vmatpush2.msra.mxu0 0.0
    %1625 = vmatprep.subr.mxu0 0.0
    %1626 = vmatpush2.msra.mxu0 0.0
    %1627 = vmatprep.subr.mxu0 0.0
    %1628 = vmatpush2.msra.mxu0 0.0
    %1629 = vmatprep.subr.mxu0 0.0
    %1630 = vmatpush2.msra.mxu0 0.0
    %1631 = vmatprep.subr.mxu0 0.0
    %1632 = vmatpush2.msra.mxu0 0.0
    %1633 = vmatprep.subr.mxu0 0.0
    %1634 = vmatpush2.msra.mxu0 0.0
    %1635 = vmatprep.subr.mxu0 0.0
    %1636 = vmatpush2.msra.mxu0 0.0
    %1637 = vmatprep.subr.mxu0 0.0
    %1638 = vmatpush2.msra.mxu0 0.0
    %1639 = vmatprep.subr.mxu0 0.0
    %1640 = vmatpush2.msra.mxu0 0.0
    %1641 = vmatprep.subr.mxu0 0.0
    %1642 = vmatpush2.msra.mxu0 0.0
    %1643 = vmatprep.subr.mxu0 0.0
    %1644 = vmatpush2.msra.mxu0 0.0
    %1645 = vmatprep.subr.mxu0 0.0
    %1646 = vmatpush2.msra.mxu0 0.0
    %1647 = vmatprep.subr.mxu0 0.0
    %1648 = vmatpush2.msra.mxu0 0.0
    %1649 = vmatprep.mubr.f32.mxu0 0.0
    %1650 = vmatmul.mubr.f32.gmra.mxu0 %v1583
    %v1651 = vpop.f32.mrf.mxu0
    %v1652 = vadd.f32 0.0, %v1651
    %v1653 = vpop.f32.mrf.mxu0
    %v1654 = vadd.f32 0.0, %v1653
    %1655 = vdwg.mxu0
    %v1656 = vadd.f32 %v1467, %v1652
    %v1657 = vadd.f32 %v1468, %v1654
    %1658 = vrot.lane.b32.xlu0 %v1569, 32
    %v1659 = vpop.permute.xlu0 %1658
    %vm1661 = vcmask 261124
    %1662 = vst.msk [vmem:[#allocation6 - $0x4] sm:$0xf0] %vm1661, %v1659
    %1664 = vrot.lane.b32.xlu0 %v1563, 96
    %v1665 = vpop.permute.xlu0 %1664
    %1667 = vst.msk [vmem:[#allocation8 - $0x4] sm:$0xf0] %vm1661, %v1665
    %v1668 = vld [vmem:[%s7] sm:$0x1]
    %v1669 = vadd.f32 %v1668, %v1656
    %v1672 = vunpack.c.l.s4 1966171168
    %v1673 = vunpack.c.0.s8 %v1672
    %v1674 = vlaneseq
    %v1675 = vshrl.u32 %v1674, 7
    %v1676 = vsub.s32 %v1673, %v1675
    %v1677 = vrot.slane %v1656, %v1676
    %v1678 = vcombine.high %v1677, %v1677
    %v1680 = vunpack.c.l.s4 1966171168
    %v1681 = vunpack.c.0.s8 %v1680
    %v1682 = vlaneseq
    %v1683 = vshrl.u32 %v1682, 7
    %v1684 = vsub.s32 %v1681, %v1683
    %v1685 = vrot.slane %v1678, %v1684
    %1686 = vrot.lane.b32.xlu0 %v1685, 64
    %v1687 = vpop.permute.xlu0 %1686
    %v1689 = vadd.f32 %v1669, %v1687
    %v1692 = vunpack.c.l.s4 1966171168
    %v1693 = vunpack.c.0.s8 %v1692
    %v1694 = vlaneseq
    %v1695 = vshrl.u32 %v1694, 7
    %v1696 = vsub.s32 %v1693, %v1695
    %v1697 = vrot.slane %v1657, %v1696
    %v1699 = vunpack.c.l.s4 1966171168
    %v1700 = vunpack.c.0.s8 %v1699
    %v1701 = vlaneseq
    %v1702 = vshrl.u32 %v1701, 7
    %v1703 = vsub.s32 %v1700, %v1702
    %v1704 = vrot.slane %v1697, %v1703
    %v1705 = vcombine.high %v1704, %v1704
    %v1707 = vadd.f32 %v1689, %v1705
    %v1708 = vcombine.high %v1697, %v1697
    %v1710 = vunpack.c.l.s4 1966171168
    %v1711 = vunpack.c.0.s8 %v1710
    %v1712 = vlaneseq
    %v1713 = vshrl.u32 %v1712, 7
    %v1714 = vsub.s32 %v1711, %v1713
    %v1715 = vrot.slane %v1708, %v1714
    %v1716 = vcombine.high %v1715, %v1715
    %1717 = vrot.lane.b32.xlu0 %v1716, 64
    %v1718 = vpop.permute.xlu0 %1717
    %v1720 = vadd.f32 %v1707, %v1718
    %v1721 = vtanh.pop %v1720
    %v1722 = vld [vmem:[%s5] sm:$0xff]
    %v1723 = vld [vmem:[%s5 + $0x8] sm:$0xff]
    %v1724 = vld [vmem:[%s5 + $0x10] sm:$0xff]
    %v1725 = vld [vmem:[%s5 + $0x18] sm:$0xff]
    %v1726 = vld [vmem:[%s5 + $0x20] sm:$0xff]
    %v1727 = vld [vmem:[%s5 + $0x28] sm:$0xff]
    %v1728 = vld [vmem:[%s5 + $0x30] sm:$0xff]
    %v1729 = vld [vmem:[%s5 + $0x38] sm:$0xff]
    %v1731 = vlaneseq
    %v1732 = vshrl.u32 %v1731, 7
    %v1733 = vsub.s32 0, %v1732
    %v1734 = vrot.slane %v1668, %v1733
    %1735 = vrot.lane.b32.xlu0 %v1734, 64
    %v1736 = vpop.permute.xlu0 %1735
    %vm1738 = vcmask 523264
    %v1740 = vsel %vm1738, %v1721, 0
    %1742 = vmatprep.subr.mxu0 0.0
    %1743 = vmatpush1.msra.mxu0 0.0
    %1744 = vmatprep.subr.mxu0 0.0
    %1745 = vmatpush1.msra.mxu0 0.0
    %1746 = vmatprep.subr.mxu0 0.0
    %1747 = vmatpush1.msra.mxu0 0.0
    %1748 = vmatprep.subr.mxu0 0.0
    %1749 = vmatpush1.msra.mxu0 0.0
    %1750 = vmatprep.subr.mxu0 0.0
    %1751 = vmatpush1.msra.mxu0 0.0
    %1752 = vmatprep.subr.mxu0 0.0
    %1753 = vmatpush1.msra.mxu0 0.0
    %1754 = vmatprep.subr.mxu0 0.0
    %1755 = vmatpush1.msra.mxu0 0.0
    %1756 = vmatprep.subr.mxu0 0.0
    %1757 = vmatpush1.msra.mxu0 0.0
    %1758 = vmatprep.subr.mxu0 0.0
    %1759 = vmatpush1.msra.mxu0 %v1729
    %1760 = vmatprep.subr.mxu0 0.0
    %1761 = vmatpush1.msra.mxu0 %v1728
    %1762 = vmatprep.subr.mxu0 0.0
    %1763 = vmatpush1.msra.mxu0 %v1727
    %1764 = vmatprep.subr.mxu0 0.0
    %1765 = vmatpush1.msra.mxu0 %v1726
    %1766 = vmatprep.subr.mxu0 0.0
    %1767 = vmatpush1.msra.mxu0 %v1725
    %1768 = vmatprep.subr.mxu0 0.0
    %1769 = vmatpush1.msra.mxu0 %v1724
    %1770 = vmatprep.subr.mxu0 0.0
    %1771 = vmatpush1.msra.mxu0 %v1723
    %1772 = vmatprep.subr.mxu0 0.0
    %1773 = vmatpush1.msra.mxu0 %v1722
    %1774 = vmatprep.subr.mxu0 0.0
    %1775 = vmatpush2.msra.mxu0 0.0
    %1776 = vmatprep.subr.mxu0 0.0
    %1777 = vmatpush2.msra.mxu0 0.0
    %1778 = vmatprep.subr.mxu0 0.0
    %1779 = vmatpush2.msra.mxu0 0.0
    %1780 = vmatprep.subr.mxu0 0.0
    %1781 = vmatpush2.msra.mxu0 0.0
    %1782 = vmatprep.subr.mxu0 0.0
    %1783 = vmatpush2.msra.mxu0 0.0
    %1784 = vmatprep.subr.mxu0 0.0
    %1785 = vmatpush2.msra.mxu0 0.0
    %1786 = vmatprep.subr.mxu0 0.0
    %1787 = vmatpush2.msra.mxu0 0.0
    %1788 = vmatprep.subr.mxu0 0.0
    %1789 = vmatpush2.msra.mxu0 0.0
    %1790 = vmatprep.subr.mxu0 0.0
    %1791 = vmatpush2.msra.mxu0 0.0
    %1792 = vmatprep.subr.mxu0 0.0
    %1793 = vmatpush2.msra.mxu0 0.0
    %1794 = vmatprep.subr.mxu0 0.0
    %1795 = vmatpush2.msra.mxu0 0.0
    %1796 = vmatprep.subr.mxu0 0.0
    %1797 = vmatpush2.msra.mxu0 0.0
    %1798 = vmatprep.subr.mxu0 0.0
    %1799 = vmatpush2.msra.mxu0 0.0
    %1800 = vmatprep.subr.mxu0 0.0
    %1801 = vmatpush2.msra.mxu0 0.0
    %1802 = vmatprep.subr.mxu0 0.0
    %1803 = vmatpush2.msra.mxu0 0.0
    %1804 = vmatprep.subr.mxu0 0.0
    %1805 = vmatpush2.msra.mxu0 0.0
    %1806 = vmatprep.mubr.f32.mxu0 0.0
    %1807 = vmatmul.mubr.f32.gmra.mxu0 %v1740
    %v1808 = vpop.f32.mrf.mxu0
    %v1809 = vadd.f32 %v1736, %v1808
    %v1810 = vpop.f32.mrf.mxu0
    %1811 = vdwg.mxu0
    %v1812 = vtanh.pop %v1809
    %v1813 = vld [vmem:[%s6] sm:$0xff]
    %v1814 = vld [vmem:[%s6 + $0x8] sm:$0xff]
    %v1815 = vld [vmem:[%s6 + $0x10] sm:$0xff]
    %v1816 = vld [vmem:[%s6 + $0x18] sm:$0xff]
    %1817 = vrot.lane.b32.xlu0 %v1734, 32
    %v1818 = vpop.permute.xlu0 %1817
    %v1821 = vsel %vm162, %v1812, 0
    %1823 = vmatprep.subr.mxu0 0.0
    %1824 = vmatpush1.msra.mxu0 0.0
    %1825 = vmatprep.subr.mxu0 0.0
    %1826 = vmatpush1.msra.mxu0 0.0
    %1827 = vmatprep.subr.mxu0 0.0
    %1828 = vmatpush1.msra.mxu0 0.0
    %1829 = vmatprep.subr.mxu0 0.0
    %1830 = vmatpush1.msra.mxu0 0.0
    %1831 = vmatprep.subr.mxu0 0.0
    %1832 = vmatpush1.msra.mxu0 0.0
    %1833 = vmatprep.subr.mxu0 0.0
    %1834 = vmatpush1.msra.mxu0 0.0
    %1835 = vmatprep.subr.mxu0 0.0
    %1836 = vmatpush1.msra.mxu0 0.0
    %1837 = vmatprep.subr.mxu0 0.0
    %1838 = vmatpush1.msra.mxu0 0.0
    %1839 = vmatprep.subr.mxu0 0.0
    %1840 = vmatpush1.msra.mxu0 0.0
    %1841 = vmatprep.subr.mxu0 0.0
    %1842 = vmatpush1.msra.mxu0 0.0
    %1843 = vmatprep.subr.mxu0 0.0
    %1844 = vmatpush1.msra.mxu0 0.0
    %1845 = vmatprep.subr.mxu0 0.0
    %1846 = vmatpush1.msra.mxu0 0.0
    %1847 = vmatprep.subr.mxu0 0.0
    %1848 = vmatpush1.msra.mxu0 %v1816
    %1849 = vmatprep.subr.mxu0 0.0
    %1850 = vmatpush1.msra.mxu0 %v1815
    %1851 = vmatprep.subr.mxu0 0.0
    %1852 = vmatpush1.msra.mxu0 %v1814
    %1853 = vmatprep.subr.mxu0 0.0
    %1854 = vmatpush1.msra.mxu0 %v1813
    %1855 = vmatprep.subr.mxu0 0.0
    %1856 = vmatpush2.msra.mxu0 0.0
    %1857 = vmatprep.subr.mxu0 0.0
    %1858 = vmatpush2.msra.mxu0 0.0
    %1859 = vmatprep.subr.mxu0 0.0
    %1860 = vmatpush2.msra.mxu0 0.0
    %1861 = vmatprep.subr.mxu0 0.0
    %1862 = vmatpush2.msra.mxu0 0.0
    %1863 = vmatprep.subr.mxu0 0.0
    %1864 = vmatpush2.msra.mxu0 0.0
    %1865 = vmatprep.subr.mxu0 0.0
    %1866 = vmatpush2.msra.mxu0 0.0
    %1867 = vmatprep.subr.mxu0 0.0
    %1868 = vmatpush2.msra.mxu0 0.0
    %1869 = vmatprep.subr.mxu0 0.0
    %1870 = vmatpush2.msra.mxu0 0.0
    %1871 = vmatprep.subr.mxu0 0.0
    %1872 = vmatpush2.msra.mxu0 0.0
    %1873 = vmatprep.subr.mxu0 0.0
    %1874 = vmatpush2.msra.mxu0 0.0
    %1875 = vmatprep.subr.mxu0 0.0
    %1876 = vmatpush2.msra.mxu0 0.0
    %1877 = vmatprep.subr.mxu0 0.0
    %1878 = vmatpush2.msra.mxu0 0.0
    %1879 = vmatprep.subr.mxu0 0.0
    %1880 = vmatpush2.msra.mxu0 0.0
    %1881 = vmatprep.subr.mxu0 0.0
    %1882 = vmatpush2.msra.mxu0 0.0
    %1883 = vmatprep.subr.mxu0 0.0
    %1884 = vmatpush2.msra.mxu0 0.0
    %1885 = vmatprep.subr.mxu0 0.0
    %1886 = vmatpush2.msra.mxu0 0.0
    %1887 = vmatprep.mubr.f32.mxu0 0.0
    %1888 = vmatmul.mubr.f32.gmra.mxu0 %v1821
    %v1889 = vpop.f32.mrf.mxu0
    %v1890 = vadd.f32 %v1818, %v1889
    %v1891 = vpop.f32.mrf.mxu0
    %1892 = vdwg.mxu0
    %v1893 = vtanh.pop %v1890
    %v1894 = vmin.f32 %v1893, 0.0
    %v1895 = vand.u32 2147483647, %v1893
    %v1896 = vsub.f32 0.0, %v1895
    %v1897 = vmul.f32 %v1896, 1.442695
    %v1898 = vpow.pop %v1897
    %v1899 = vadd.f32 %v1898, 1.0
    %v1900 = vlog2.pop %v1899
    %v1901 = vmul.f32 %v1900, 0.6931472
    %v1902 = vmul.f32 -0.5, %v1898
    %v1903 = vadd.f32 %v1902, 1.0
    %v1904 = vmul.f32 %v1903, %v1898
    %v1905 = vand.u32 2147483647, %v1898
    %vm1906 = vcmp.lt.f32.partialorder %v1905, 0.0004427343
    %v1907 = vsel %vm1906, %v1904, %v1901
    %v1908 = vsub.f32 %v1894, %v1907
    %vm1909 = vcmask 57344
    %1910 = vst.msk [vmem:[#allocation5] sm:$0x1] %vm1909, %v1908
    // Predicated region
    $region38: #{forward.1} parent=1 // pred_check
      _
    $region39: #{forward.1} parent=1 // pred_check_branch
      %1912 = sbr.rel (0) target = $region41
    $region40: #{forward.1} parent=1 // pred_region
      %s1914 = ssub.s32 16, 16
      %1915 = vsyncadd [#allocation4], %s1914
      %s1917 = sshll.u32 [#allocation5], 4
      %s1918 = int_to_ptr.vmem [resolvable:$true] %s1917
      %1920 = dma.vmem_to_hbm [thread:$0]  %s1918, 16, %s8, [#allocation4]
    $region41: #{forward.1} parent=1 // pred_fallthru
      _
    // Predicated region
    $region42: #{forward.1} parent=1 // pred_check
      _
    $region43: #{forward.1} parent=1 // pred_check_branch
      %1922 = sbr.rel (0) target = $region45
    $region44: #{forward.1} parent=1 // pred_region
      %s1924 = ssub.s32 64, 64
      %1925 = vsyncadd [#allocation7], %s1924
      %s1927 = sshll.u32 [#allocation6], 4
      %s1928 = int_to_ptr.vmem [resolvable:$true] %s1927
      %1930 = dma.vmem_to_hbm [thread:$0]  %s1928, 64, %s9, [#allocation7]
    $region45: #{forward.1} parent=1 // pred_fallthru
      _
    // Predicated region
    $region46: #{forward.1} parent=1 // pred_check
      _
    $region47: #{forward.1} parent=1 // pred_check_branch
      %1932 = sbr.rel (0) target = $region49
    $region48: #{forward.1} parent=1 // pred_region
      %s1934 = ssub.s32 64, 64
      %1935 = vsyncadd [#allocation7], %s1934
      %s1937 = sshll.u32 [#allocation8], 4
      %s1938 = int_to_ptr.vmem [resolvable:$true] %s1937
      %1940 = dma.vmem_to_hbm [thread:$0]  %s1938, 64, %s10, [#allocation7]
    $region49: #{forward.1} parent=1 // pred_fallthru
      _
    // Predicated region
    $region50: #{forward.1} parent=1 // pred_check
      _
    $region51: #{forward.1} parent=1 // pred_check_branch
      %1942 = sbr.rel (0) target = $region53
    $region52: #{forward.1} parent=1 // pred_region
      %1943 = dma.done [#allocation4], 16
    $region53: #{forward.1} parent=1 // pred_fallthru
      _
    // Predicated region
    $region54: #{forward.1} parent=1 // pred_check
      _
    $region55: #{forward.1} parent=1 // pred_check_branch
      %1945 = sbr.rel (0) target = $region57
    $region56: #{forward.1} parent=1 // pred_region
      %1946 = dma.done [#allocation7], 64
    $region57: #{forward.1} parent=1 // pred_fallthru
      _
    // Predicated region
    $region58: #{forward.1} parent=1 // pred_check
      _
    $region59: #{forward.1} parent=1 // pred_check_branch
      %1948 = sbr.rel (0) target = $region61
    $region60: #{forward.1} parent=1 // pred_region
      %1949 = dma.done [#allocation7], 64
    $region61: #{forward.1} parent=1 // pred_fallthru
      _
    %1950 = vsyncpa [#allocation3], 1
    %1951 = vsyncpa [#allocation4], 1
    %1952 = vsyncpa [#allocation7], 1

</llo_original>
